<compile_context>
chip_gen: v7x
topology: tpu7x:2x2x1
jax: 0.10.0
libtpu: 0.0.40
codegen_flags: <defaults>
</compile_context>

<pallas_src>
import functools

import jax
import jax.numpy as jnp
from jax.experimental import pallas as pl
from jax.experimental.pallas import tpu as pltpu

EPS = 1e-5  # PyTorch LayerNorm default


def _layernorm(x, w, b):
    mean = jnp.mean(x, axis=-1, keepdims=True)
    var = jnp.mean((x - mean) ** 2, axis=-1, keepdims=True)
    return (x - mean) * jax.lax.rsqrt(var + EPS) * w + b


def decoder_kernel(x_ref, mask_ref,
                   ipw_ref, ipb_ref, ow_ref, ob_ref,
                   f1w_ref, f1b_ref, f2w_ref, f2b_ref,
                   ln1w_ref, ln1b_ref, ln2w_ref, ln2b_ref,
                   fnw_ref, fnb_ref,
                   o_ref,
                   acc_ref,
                   *, nhead, bblk, seq):
    """One (batch_block, layer) grid step of the fused decoder.

    Grid = (B//Bblk, L); the layer axis is 'arbitrary'.  The running f32
    activation for the whole batch block (Bblk*S rows) is resident in the VMEM
    scratch `acc_ref`; the output block index is constant across the layer
    axis so HBM writeback happens once per batch block, after the fused final
    LayerNorm.
    """
    layer = pl.program_id(1)

    @pl.when(layer == 0)
    def _():
        acc_ref[...] = x_ref[...].astype(jnp.float32)

    x = acc_ref[...]                            # (M, D) f32, M = Bblk*S
    M, D = x.shape
    hd = D // nhead
    mask = mask_ref[...]                        # (S, S) additive f32 mask

    # ---- LN1 + fused QKV projection: one (M, D) @ (D, 3D) MXU pass ----
    # (1/sqrt(hd) is already folded into the Q columns of ipw/ipb at pack time.)
    ln1 = _layernorm(x, ln1w_ref[0], ln1b_ref[0])
    qkv = jnp.dot(ln1.astype(jnp.bfloat16), ipw_ref[0],
                  preferred_element_type=jnp.float32) + ipb_ref[0]
    q = qkv[:, :D]
    k = qkv[:, D:2 * D]
    v = qkv[:, 2 * D:]

    # ---- multi-head self-attention, batched over (batch_in_block, head) ----
    # Static slices + leading-axis stack (known-lowerable at any head dim;
    # lane-aligned whole-vreg moves whenever hd is a multiple of 128).
    def split_heads(t):
        return jnp.stack(
            [t[b * seq:(b + 1) * seq, h * hd:(h + 1) * hd]
             for b in range(bblk) for h in range(nhead)],
            axis=0)                              # (Bblk*H, S, hd)

    qh = split_heads(q).astype(jnp.bfloat16)
    kh = split_heads(k).astype(jnp.bfloat16)
    vh = split_heads(v).astype(jnp.bfloat16)

    s = jnp.einsum("nqd,nkd->nqk", qh, kh,
                   preferred_element_type=jnp.float32) + mask      # (N, S, S)
    m = jnp.max(s, axis=-1, keepdims=True)
    e = jnp.exp(s - m)
    # approx reciprocal runs on the EUP slot; ~1e-3-level relative error per
    # softmax row, covered by the test tolerance below.
    p = e * pl.reciprocal(jnp.sum(e, axis=-1, keepdims=True), approx=True)

    ctx = jnp.einsum("nqk,nkd->nqd", p.astype(jnp.bfloat16), vh,
                     preferred_element_type=jnp.float32)           # (N, S, hd)

    # merge heads (lane concat) and batch rows (sublane concat) back to (M, D)
    attn = jnp.concatenate(
        [jnp.concatenate([ctx[b * nhead + h] for h in range(nhead)], axis=-1)
         for b in range(bblk)],
        axis=0)                                                    # (M, D)

    attn = jnp.dot(attn.astype(jnp.bfloat16), ow_ref[0],
                   preferred_element_type=jnp.float32) + ob_ref[0]

    x = x + attn                                # residual (dropout == identity)

    # ---- LN2 + feed-forward ----
    ln2 = _layernorm(x, ln2w_ref[0], ln2b_ref[0])
    h1 = jnp.dot(ln2.astype(jnp.bfloat16), f1w_ref[0],
                 preferred_element_type=jnp.float32) + f1b_ref[0]
    h1 = jnp.maximum(h1, 0.0)                   # ReLU
    ff = jnp.dot(h1.astype(jnp.bfloat16), f2w_ref[0],
                 preferred_element_type=jnp.float32) + f2b_ref[0]

    x = x + ff                                  # residual
    acc_ref[...] = x

    # ---- final LayerNorm fused into the last layer step ----
    @pl.when(layer == pl.num_programs(1) - 1)
    def _():
        o_ref[...] = _layernorm(x, fnw_ref[...], fnb_ref[...])


def pack_layer_params(layer_params, nhead):
    """Stack per-layer PyTorch-shaped params for the kernel.

    Matmul weights are pre-transposed and cast to bf16 once; biases and LN
    params stay f32 as (1, X) rows.  The 1/sqrt(head_dim) attention scale is
    folded into the Q columns of the in-projection weight/bias (in f32, before
    the bf16 cast), with a leading `layer` axis on everything.
    """
    bf16 = jnp.bfloat16
    d_model = layer_params[0]["in_proj_w"].shape[1]
    hd = d_model // nhead
    scale = 1.0 / (hd ** 0.5)

    def ipw_t(p):
        w = p["in_proj_w"].T.astype(jnp.float32)          # (D, 3D)
        w = w.at[:, :d_model].multiply(scale)             # scale Q columns
        return w.astype(bf16)

    def ipb_row(p):
        b = p["in_proj_b"].astype(jnp.float32)
        b = b.at[:d_model].multiply(scale)                 # scale Q bias
        return b[None, :]

    def stack(fn):
        return jnp.stack([fn(p) for p in layer_params], axis=0)

    return dict(
        ipw=stack(ipw_t),                                  # (L, D, 3D) bf16
        ipb=stack(ipb_row),                                # (L, 1, 3D) f32
        ow=stack(lambda p: p["out_proj_w"].T.astype(bf16)),  # (L, D, D)
        ob=stack(lambda p: p["out_proj_b"][None, :]),      # (L, 1, D)
        f1w=stack(lambda p: p["lin1_w"].T.astype(bf16)),   # (L, D, F)
        f1b=stack(lambda p: p["lin1_b"][None, :]),         # (L, 1, F)
        f2w=stack(lambda p: p["lin2_w"].T.astype(bf16)),   # (L, F, D)
        f2b=stack(lambda p: p["lin2_b"][None, :]),         # (L, 1, D)
        ln1w=stack(lambda p: p["ln1_w"][None, :]),         # (L, 1, D)
        ln1b=stack(lambda p: p["ln1_b"][None, :]),
        ln2w=stack(lambda p: p["ln2_w"][None, :]),
        ln2b=stack(lambda p: p["ln2_b"][None, :]),
    )


def _choose_batch_block(batch, seq, target_rows=512):
    """Largest divisor of `batch` keeping Bblk*S within a VMEM-friendly row
    budget (bigger Bblk -> fewer weight re-streams and a larger MXU M dim)."""
    best = 1
    for cand in range(1, batch + 1):
        if batch % cand == 0 and cand * seq <= max(target_rows, seq):
            best = cand
    return best


def _vmem_limit_bytes():
    """Raise the scoped-VMEM limit (default 16/32 MiB) with ~15% headroom."""
    try:
        cap = pltpu.get_tpu_info().vmem_capacity_bytes
        return int(cap * 0.85)
    except Exception:
        return 48 * 1024 * 1024


def decoder_forward(tgt, tgt_mask, layer_params, final_ln, nhead):
    """Fused decoder: single pallas_call over grid (batch_blocks, num_layers)."""
    B, S, D = tgt.shape
    L = len(layer_params)
    F = layer_params[0]["lin1_w"].shape[0]
    bblk = _choose_batch_block(B, S)
    M = bblk * S

    p = pack_layer_params(layer_params, nhead)
    fnw = final_ln["w"][None, :].astype(jnp.float32)   # (1, D)
    fnb = final_ln["b"][None, :].astype(jnp.float32)   # (1, D)

    tgt_flat = tgt.reshape(B * S, D)                   # flattened rows

    batch_idx = lambda b, l: (b, 0)       # activations: resident across layers
    layer_idx = lambda b, l: (l, 0, 0)    # per-layer stacked weights
    const2 = lambda b, l: (0, 0)          # replicated 2-D arrays

    w_specs = [
        pl.BlockSpec((1, D, 3 * D), layer_idx),   # ipw (bf16, pre-transposed, Q-scaled)
        pl.BlockSpec((1, 1, 3 * D), layer_idx),   # ipb
        pl.BlockSpec((1, D, D), layer_idx),       # ow
        pl.BlockSpec((1, 1, D), layer_idx),       # ob
        pl.BlockSpec((1, D, F), layer_idx),       # f1w
        pl.BlockSpec((1, 1, F), layer_idx),       # f1b
        pl.BlockSpec((1, F, D), layer_idx),       # f2w
        pl.BlockSpec((1, 1, D), layer_idx),       # f2b
        pl.BlockSpec((1, 1, D), layer_idx),       # ln1w
        pl.BlockSpec((1, 1, D), layer_idx),       # ln1b
        pl.BlockSpec((1, 1, D), layer_idx),       # ln2w
        pl.BlockSpec((1, 1, D), layer_idx),       # ln2b
    ]

    out_flat = pl.pallas_call(
        functools.partial(decoder_kernel, nhead=nhead, bblk=bblk, seq=S),
        out_shape=jax.ShapeDtypeStruct((B * S, D), jnp.float32),
        grid=(B // bblk, L),
        in_specs=[pl.BlockSpec((M, D), batch_idx),        # tgt (flattened)
                  pl.BlockSpec((S, S), const2)]           # additive mask
                 + w_specs
                 + [pl.BlockSpec((1, D), const2),         # final LN weight
                    pl.BlockSpec((1, D), const2)],        # final LN bias
        out_specs=pl.BlockSpec((M, D), batch_idx),
        scratch_shapes=[pltpu.VMEM((M, D), jnp.float32)],  # resident activation
        compiler_params=pltpu.CompilerParams(
            dimension_semantics=("parallel", "arbitrary"),
            vmem_limit_bytes=_vmem_limit_bytes()),
    )(tgt_flat, tgt_mask,
      p["ipw"], p["ipb"], p["ow"], p["ob"],
      p["f1w"], p["f1b"], p["f2w"], p["f2b"],
      p["ln1w"], p["ln1b"], p["ln2w"], p["ln2b"],
      fnw, fnb)

    return out_flat.reshape(B, S, D)


# ----------------------- pure-JAX f32 reference (for checking) -------------
def reference_decoder(tgt, mask, layer_params, final_ln, nhead):
    x = tgt
    B, S, D = x.shape
    hd = D // nhead
    for p in layer_params:
        ln1 = _layernorm(x, p["ln1_w"], p["ln1_b"])
        ipw, ipb = p["in_proj_w"], p["in_proj_b"]
        q = ln1 @ ipw[:D].T + ipb[:D]
        k = ln1 @ ipw[D:2 * D].T + ipb[D:2 * D]
        v = ln1 @ ipw[2 * D:].T + ipb[2 * D:]
        qh = q.reshape(B, S, nhead, hd).transpose(0, 2, 1, 3)
        kh = k.reshape(B, S, nhead, hd).transpose(0, 2, 1, 3)
        vh = v.reshape(B, S, nhead, hd).transpose(0, 2, 1, 3)
        s = jnp.einsum("bhqd,bhkd->bhqk", qh, kh) / (hd ** 0.5) + mask
        a = jax.nn.softmax(s, axis=-1)
        o = jnp.einsum("bhqk,bhkd->bhqd", a, vh)
        o = o.transpose(0, 2, 1, 3).reshape(B, S, D)
        o = o @ p["out_proj_w"].T + p["out_proj_b"]
        x = x + o
        ln2 = _layernorm(x, p["ln2_w"], p["ln2_b"])
        h1 = jnp.maximum(ln2 @ p["lin1_w"].T + p["lin1_b"], 0.0)
        x = x + h1 @ p["lin2_w"].T + p["lin2_b"]
    return _layernorm(x, final_ln["w"], final_ln["b"])


# ----------------------- parameter init (PyTorch-shaped) -------------------
def init_layer_params(key, d_model, dim_ff):
    ks = jax.random.split(key, 6)
    sd = 0.02
    return {
        "in_proj_w": sd * jax.random.normal(ks[0], (3 * d_model, d_model), jnp.float32),
        "in_proj_b": jnp.zeros((3 * d_model,), jnp.float32),
        "out_proj_w": sd * jax.random.normal(ks[1], (d_model, d_model), jnp.float32),
        "out_proj_b": jnp.zeros((d_model,), jnp.float32),
        "lin1_w": sd * jax.random.normal(ks[2], (dim_ff, d_model), jnp.float32),
        "lin1_b": 0.01 * jax.random.normal(ks[3], (dim_ff,), jnp.float32),
        "lin2_w": sd * jax.random.normal(ks[4], (d_model, dim_ff), jnp.float32),
        "lin2_b": 0.01 * jax.random.normal(ks[5], (d_model,), jnp.float32),
        "ln1_w": jnp.ones((d_model,), jnp.float32),
        "ln1_b": jnp.zeros((d_model,), jnp.float32),
        "ln2_w": jnp.ones((d_model,), jnp.float32),
        "ln2_b": jnp.zeros((d_model,), jnp.float32),
    }


if __name__ == "__main__":
    num_layers = 2
    d_model = 32
    n_heads = 4
    dim_feedforward = 64
    B, S = 2, 8

    key = jax.random.PRNGKey(0)
    key, kx, *lkeys = jax.random.split(key, 2 + num_layers)

    tgt = jax.random.normal(kx, (B, S, d_model), jnp.float32)
    # causal additive mask (0 on/below diagonal, large negative above)
    causal = jnp.tril(jnp.ones((S, S), jnp.float32))
    tgt_mask = jnp.where(causal == 1.0, 0.0, -1e9).astype(jnp.float32)

    layer_params = [init_layer_params(lk, d_model, dim_feedforward)
                    for lk in lkeys]
    final_ln = {"w": jnp.ones((d_model,), jnp.float32),
                "b": jnp.zeros((d_model,), jnp.float32)}

    out = decoder_forward(tgt, tgt_mask, layer_params, final_ln, n_heads)
    out = jax.block_until_ready(out)

    ref = reference_decoder(tgt, tgt_mask, layer_params, final_ln, n_heads)
    assert out.shape == (B, S, d_model)
    # Kernel uses bf16 matmul operands (f32 accumulation) and an EUP-approx
    # softmax reciprocal; reference is pure f32, hence the loosened tolerance
    # (observed error ~1e-4 at these scales).
    max_diff = float(jnp.max(jnp.abs(out - ref)))
    assert jnp.allclose(out, ref, atol=5e-3, rtol=5e-3), (
        f"mismatch vs reference: max abs diff {max_diff}")

    print("KERNEL_OK")
</pallas_src>

<mosaic_0001>
module attributes {stable_mosaic.version = 11 : i64} {
  func.func @decoder_kernel(%arg0: i32, %arg1: i32, %arg2: memref<16x32xf32, #tpu.memory_space<vmem>>, %arg3: memref<8x8xf32, #tpu.memory_space<vmem>>, %arg4: memref<1x32x96xbf16, #tpu.memory_space<vmem>>, %arg5: memref<1x1x96xf32, #tpu.memory_space<vmem>>, %arg6: memref<1x32x32xbf16, #tpu.memory_space<vmem>>, %arg7: memref<1x1x32xf32, #tpu.memory_space<vmem>>, %arg8: memref<1x32x64xbf16, #tpu.memory_space<vmem>>, %arg9: memref<1x1x64xf32, #tpu.memory_space<vmem>>, %arg10: memref<1x64x32xbf16, #tpu.memory_space<vmem>>, %arg11: memref<1x1x32xf32, #tpu.memory_space<vmem>>, %arg12: memref<1x1x32xf32, #tpu.memory_space<vmem>>, %arg13: memref<1x1x32xf32, #tpu.memory_space<vmem>>, %arg14: memref<1x1x32xf32, #tpu.memory_space<vmem>>, %arg15: memref<1x1x32xf32, #tpu.memory_space<vmem>>, %arg16: memref<1x32xf32, #tpu.memory_space<vmem>>, %arg17: memref<1x32xf32, #tpu.memory_space<vmem>>, %arg18: memref<16x32xf32, #tpu.memory_space<vmem>>, %arg19: memref<16x32xf32, #tpu.memory_space<vmem>>) attributes {dimension_semantics = [#tpu.dimension_semantics<parallel>, #tpu.dimension_semantics<arbitrary>], iteration_bounds = array<i64: 1, 2>, scalar_prefetch = 0 : i64, scratch_operands = 1 : i64, tpu.core_type = #tpu.core_type<tc>, window_params = [{transform_indices = @transform_0, window_bounds = array<i64: 16, 32>}, {pipeline_mode = #tpu.pipeline_mode<synchronous>, transform_indices = @transform_1, window_bounds = array<i64: 8, 8>}, {transform_indices = @transform_2, window_bounds = array<i64: 1, 32, 96>}, {transform_indices = @transform_3, window_bounds = array<i64: 1, 1, 96>}, {transform_indices = @transform_4, window_bounds = array<i64: 1, 32, 32>}, {transform_indices = @transform_5, window_bounds = array<i64: 1, 1, 32>}, {transform_indices = @transform_6, window_bounds = array<i64: 1, 32, 64>}, {transform_indices = @transform_7, window_bounds = array<i64: 1, 1, 64>}, {transform_indices = @transform_8, window_bounds = array<i64: 1, 64, 32>}, {transform_indices = @transform_9, window_bounds = array<i64: 1, 1, 32>}, {transform_indices = @transform_10, window_bounds = array<i64: 1, 1, 32>}, {transform_indices = @transform_11, window_bounds = array<i64: 1, 1, 32>}, {transform_indices = @transform_12, window_bounds = array<i64: 1, 1, 32>}, {transform_indices = @transform_13, window_bounds = array<i64: 1, 1, 32>}, {pipeline_mode = #tpu.pipeline_mode<synchronous>, transform_indices = @transform_14, window_bounds = array<i64: 1, 32>}, {pipeline_mode = #tpu.pipeline_mode<synchronous>, transform_indices = @transform_15, window_bounds = array<i64: 1, 32>}, {transform_indices = @transform_16, window_bounds = array<i64: 16, 32>}]} {
    %c0_i32 = arith.constant 0 : i32
    %0 = arith.cmpi eq, %arg1, %c0_i32 : i32
    %1 = arith.extui %0 : i1 to i32
    %c0_i32_0 = arith.constant 0 : i32
    %2 = arith.cmpi ne, %1, %c0_i32_0 : i32
    scf.if %2 {
      %c0_61 = arith.constant 0 : index
      %c0_62 = arith.constant 0 : index
      %189 = vector.load %arg2[%c0_61, %c0_62] : memref<16x32xf32, #tpu.memory_space<vmem>>, vector<16x32xf32>
      %c0_63 = arith.constant 0 : index
      %c0_64 = arith.constant 0 : index
      %190 = vector.load %arg19[%c0_63, %c0_64] : memref<16x32xf32, #tpu.memory_space<vmem>>, vector<16x32xf32>
      tpu.vector_store %arg19[%c0_63, %c0_64], %189 {strides = array<i32>} : memref<16x32xf32, #tpu.memory_space<vmem>>, vector<16x32xf32>,
    } else {
    }
    %c0 = arith.constant 0 : index
    %c0_1 = arith.constant 0 : index
    %3 = vector.load %arg19[%c0, %c0_1] : memref<16x32xf32, #tpu.memory_space<vmem>>, vector<16x32xf32>
    %c0_2 = arith.constant 0 : index
    %c0_3 = arith.constant 0 : index
    %4 = vector.load %arg3[%c0_2, %c0_3] : memref<8x8xf32, #tpu.memory_space<vmem>>, vector<8x8xf32>
    %c0_4 = arith.constant 0 : index
    %c0_5 = arith.constant 0 : index
    %c0_6 = arith.constant 0 : index
    %5 = vector.load %arg12[%c0_4, %c0_5, %c0_6] : memref<1x1x32xf32, #tpu.memory_space<vmem>>, vector<1x1x32xf32>
    %6 = vector.shape_cast %5 : vector<1x1x32xf32> to vector<1x32xf32>
    %c0_7 = arith.constant 0 : index
    %c0_8 = arith.constant 0 : index
    %c0_9 = arith.constant 0 : index
    %7 = vector.load %arg13[%c0_7, %c0_8, %c0_9] : memref<1x1x32xf32, #tpu.memory_space<vmem>>, vector<1x1x32xf32>
    %8 = vector.shape_cast %7 : vector<1x1x32xf32> to vector<1x32xf32>
    %cst = arith.constant dense<0.000000e+00> : vector<16xf32>
    %9 = vector.multi_reduction <add>, %3, %cst [1] : vector<16x32xf32> to vector<16xf32>
    %10 = vector.shape_cast %9 : vector<16xf32> to vector<16x1xf32>
    %cst_10 = arith.constant 3.200000e+01 : f32
    %11 = vector.broadcast %cst_10 : f32 to vector<16x1xf32>
    %12 = arith.divf %10, %11 : vector<16x1xf32>
    %13 = vector.broadcast %12 : vector<16x1xf32> to vector<16x32xf32>
    %14 = arith.subf %3, %13 : vector<16x32xf32>
    %15 = arith.mulf %14, %14 : vector<16x32xf32>
    %cst_11 = arith.constant dense<0.000000e+00> : vector<16xf32>
    %16 = vector.multi_reduction <add>, %15, %cst_11 [1] : vector<16x32xf32> to vector<16xf32>
    %17 = vector.shape_cast %16 : vector<16xf32> to vector<16x1xf32>
    %cst_12 = arith.constant 3.200000e+01 : f32
    %18 = vector.broadcast %cst_12 : f32 to vector<16x1xf32>
    %19 = arith.divf %17, %18 : vector<16x1xf32>
    %20 = vector.broadcast %12 : vector<16x1xf32> to vector<16x32xf32>
    %21 = arith.subf %3, %20 : vector<16x32xf32>
    %cst_13 = arith.constant 9.99999974E-6 : f32
    %22 = vector.broadcast %cst_13 : f32 to vector<16x1xf32>
    %23 = arith.addf %19, %22 : vector<16x1xf32>
    %24 = math.rsqrt %23 : vector<16x1xf32>
    %25 = vector.broadcast %24 : vector<16x1xf32> to vector<16x32xf32>
    %26 = arith.mulf %21, %25 : vector<16x32xf32>
    %27 = vector.broadcast %6 : vector<1x32xf32> to vector<16x32xf32>
    %28 = arith.mulf %26, %27 : vector<16x32xf32>
    %29 = vector.broadcast %8 : vector<1x32xf32> to vector<16x32xf32>
    %30 = arith.addf %28, %29 : vector<16x32xf32>
    %31 = arith.truncf %30 : vector<16x32xf32> to vector<16x32xbf16>
    %c0_14 = arith.constant 0 : index
    %c0_15 = arith.constant 0 : index
    %c0_16 = arith.constant 0 : index
    %32 = vector.load %arg4[%c0_14, %c0_15, %c0_16] : memref<1x32x96xbf16, #tpu.memory_space<vmem>>, vector<1x32x96xbf16>
    %33 = vector.shape_cast %32 : vector<1x32x96xbf16> to vector<32x96xbf16>
    %cst_17 = arith.constant dense<0.000000e+00> : vector<16x96xf32>
    %34 = tpu.matmul %31, %33, %cst_17 {dimension_numbers = #tpu.dot_dimension_numbers<[1], [0], [0], [1], [0, 0, 1, 1], [], []>} : vector<16x32xbf16>, vector<32x96xbf16>, vector<16x96xf32> -> vector<16x96xf32>
    %c0_18 = arith.constant 0 : index
    %c0_19 = arith.constant 0 : index
    %c0_20 = arith.constant 0 : index
    %35 = vector.load %arg5[%c0_18, %c0_19, %c0_20] : memref<1x1x96xf32, #tpu.memory_space<vmem>>, vector<1x1x96xf32>
    %36 = vector.shape_cast %35 : vector<1x1x96xf32> to vector<1x96xf32>
    %37 = vector.broadcast %36 : vector<1x96xf32> to vector<16x96xf32>
    %38 = arith.addf %34, %37 : vector<16x96xf32>
    %39 = vector.extract_strided_slice %38 {offsets = [0, 0], sizes = [16, 32], strides = [1, 1]} : vector<16x96xf32> to vector<16x32xf32>
    %40 = vector.extract_strided_slice %38 {offsets = [0, 32], sizes = [16, 32], strides = [1, 1]} : vector<16x96xf32> to vector<16x32xf32>
    %41 = vector.extract_strided_slice %38 {offsets = [0, 64], sizes = [16, 32], strides = [1, 1]} : vector<16x96xf32> to vector<16x32xf32>
    %42 = vector.extract_strided_slice %39 {offsets = [0, 0], sizes = [8, 8], strides = [1, 1]} : vector<16x32xf32> to vector<8x8xf32>
    %43 = vector.extract_strided_slice %39 {offsets = [0, 8], sizes = [8, 8], strides = [1, 1]} : vector<16x32xf32> to vector<8x8xf32>
    %44 = vector.extract_strided_slice %39 {offsets = [0, 16], sizes = [8, 8], strides = [1, 1]} : vector<16x32xf32> to vector<8x8xf32>
    %45 = vector.extract_strided_slice %39 {offsets = [0, 24], sizes = [8, 8], strides = [1, 1]} : vector<16x32xf32> to vector<8x8xf32>
    %46 = vector.extract_strided_slice %39 {offsets = [8, 0], sizes = [8, 8], strides = [1, 1]} : vector<16x32xf32> to vector<8x8xf32>
    %47 = vector.extract_strided_slice %39 {offsets = [8, 8], sizes = [8, 8], strides = [1, 1]} : vector<16x32xf32> to vector<8x8xf32>
    %48 = vector.extract_strided_slice %39 {offsets = [8, 16], sizes = [8, 8], strides = [1, 1]} : vector<16x32xf32> to vector<8x8xf32>
    %49 = vector.extract_strided_slice %39 {offsets = [8, 24], sizes = [8, 8], strides = [1, 1]} : vector<16x32xf32> to vector<8x8xf32>
    %50 = vector.shape_cast %42 : vector<8x8xf32> to vector<1x8x8xf32>
    %51 = vector.shape_cast %43 : vector<8x8xf32> to vector<1x8x8xf32>
    %52 = vector.shape_cast %44 : vector<8x8xf32> to vector<1x8x8xf32>
    %53 = vector.shape_cast %45 : vector<8x8xf32> to vector<1x8x8xf32>
    %54 = vector.shape_cast %46 : vector<8x8xf32> to vector<1x8x8xf32>
    %55 = vector.shape_cast %47 : vector<8x8xf32> to vector<1x8x8xf32>
    %56 = vector.shape_cast %48 : vector<8x8xf32> to vector<1x8x8xf32>
    %57 = vector.shape_cast %49 : vector<8x8xf32> to vector<1x8x8xf32>
    %58 = tpu.concatenate %50, %51, %52, %53, %54, %55, %56, %57 in 0 : vector<1x8x8xf32>, vector<1x8x8xf32>, vector<1x8x8xf32>, vector<1x8x8xf32>, vector<1x8x8xf32>, vector<1x8x8xf32>, vector<1x8x8xf32>, vector<1x8x8xf32> -> vector<8x8x8xf32>
    %59 = arith.truncf %58 : vector<8x8x8xf32> to vector<8x8x8xbf16>
    %60 = vector.extract_strided_slice %40 {offsets = [0, 0], sizes = [8, 8], strides = [1, 1]} : vector<16x32xf32> to vector<8x8xf32>
    %61 = vector.extract_strided_slice %40 {offsets = [0, 8], sizes = [8, 8], strides = [1, 1]} : vector<16x32xf32> to vector<8x8xf32>
    %62 = vector.extract_strided_slice %40 {offsets = [0, 16], sizes = [8, 8], strides = [1, 1]} : vector<16x32xf32> to vector<8x8xf32>
    %63 = vector.extract_strided_slice %40 {offsets = [0, 24], sizes = [8, 8], strides = [1, 1]} : vector<16x32xf32> to vector<8x8xf32>
    %64 = vector.extract_strided_slice %40 {offsets = [8, 0], sizes = [8, 8], strides = [1, 1]} : vector<16x32xf32> to vector<8x8xf32>
    %65 = vector.extract_strided_slice %40 {offsets = [8, 8], sizes = [8, 8], strides = [1, 1]} : vector<16x32xf32> to vector<8x8xf32>
    %66 = vector.extract_strided_slice %40 {offsets = [8, 16], sizes = [8, 8], strides = [1, 1]} : vector<16x32xf32> to vector<8x8xf32>
    %67 = vector.extract_strided_slice %40 {offsets = [8, 24], sizes = [8, 8], strides = [1, 1]} : vector<16x32xf32> to vector<8x8xf32>
    %68 = vector.shape_cast %60 : vector<8x8xf32> to vector<1x8x8xf32>
    %69 = vector.shape_cast %61 : vector<8x8xf32> to vector<1x8x8xf32>
    %70 = vector.shape_cast %62 : vector<8x8xf32> to vector<1x8x8xf32>
    %71 = vector.shape_cast %63 : vector<8x8xf32> to vector<1x8x8xf32>
    %72 = vector.shape_cast %64 : vector<8x8xf32> to vector<1x8x8xf32>
    %73 = vector.shape_cast %65 : vector<8x8xf32> to vector<1x8x8xf32>
    %74 = vector.shape_cast %66 : vector<8x8xf32> to vector<1x8x8xf32>
    %75 = vector.shape_cast %67 : vector<8x8xf32> to vector<1x8x8xf32>
    %76 = tpu.concatenate %68, %69, %70, %71, %72, %73, %74, %75 in 0 : vector<1x8x8xf32>, vector<1x8x8xf32>, vector<1x8x8xf32>, vector<1x8x8xf32>, vector<1x8x8xf32>, vector<1x8x8xf32>, vector<1x8x8xf32>, vector<1x8x8xf32> -> vector<8x8x8xf32>
    %77 = arith.truncf %76 : vector<8x8x8xf32> to vector<8x8x8xbf16>
    %78 = vector.extract_strided_slice %41 {offsets = [0, 0], sizes = [8, 8], strides = [1, 1]} : vector<16x32xf32> to vector<8x8xf32>
    %79 = vector.extract_strided_slice %41 {offsets = [0, 8], sizes = [8, 8], strides = [1, 1]} : vector<16x32xf32> to vector<8x8xf32>
    %80 = vector.extract_strided_slice %41 {offsets = [0, 16], sizes = [8, 8], strides = [1, 1]} : vector<16x32xf32> to vector<8x8xf32>
    %81 = vector.extract_strided_slice %41 {offsets = [0, 24], sizes = [8, 8], strides = [1, 1]} : vector<16x32xf32> to vector<8x8xf32>
    %82 = vector.extract_strided_slice %41 {offsets = [8, 0], sizes = [8, 8], strides = [1, 1]} : vector<16x32xf32> to vector<8x8xf32>
    %83 = vector.extract_strided_slice %41 {offsets = [8, 8], sizes = [8, 8], strides = [1, 1]} : vector<16x32xf32> to vector<8x8xf32>
    %84 = vector.extract_strided_slice %41 {offsets = [8, 16], sizes = [8, 8], strides = [1, 1]} : vector<16x32xf32> to vector<8x8xf32>
    %85 = vector.extract_strided_slice %41 {offsets = [8, 24], sizes = [8, 8], strides = [1, 1]} : vector<16x32xf32> to vector<8x8xf32>
    %86 = vector.shape_cast %78 : vector<8x8xf32> to vector<1x8x8xf32>
    %87 = vector.shape_cast %79 : vector<8x8xf32> to vector<1x8x8xf32>
    %88 = vector.shape_cast %80 : vector<8x8xf32> to vector<1x8x8xf32>
    %89 = vector.shape_cast %81 : vector<8x8xf32> to vector<1x8x8xf32>
    %90 = vector.shape_cast %82 : vector<8x8xf32> to vector<1x8x8xf32>
    %91 = vector.shape_cast %83 : vector<8x8xf32> to vector<1x8x8xf32>
    %92 = vector.shape_cast %84 : vector<8x8xf32> to vector<1x8x8xf32>
    %93 = vector.shape_cast %85 : vector<8x8xf32> to vector<1x8x8xf32>
    %94 = tpu.concatenate %86, %87, %88, %89, %90, %91, %92, %93 in 0 : vector<1x8x8xf32>, vector<1x8x8xf32>, vector<1x8x8xf32>, vector<1x8x8xf32>, vector<1x8x8xf32>, vector<1x8x8xf32>, vector<1x8x8xf32>, vector<1x8x8xf32> -> vector<8x8x8xf32>
    %95 = arith.truncf %94 : vector<8x8x8xf32> to vector<8x8x8xbf16>
    "tpu.trace_start"() <{level = 10 : i32, message = "nqd,nkd->nqk"}> : () -> ()
    %cst_21 = arith.constant dense<0.000000e+00> : vector<8x8x8xf32>
    %96 = tpu.matmul %59, %77, %cst_21 {dimension_numbers = #tpu.dot_dimension_numbers<[2], [2], [1], [1], [0, 0, 0, 1, 1, 1], [0], [0]>} : vector<8x8x8xbf16>, vector<8x8x8xbf16>, vector<8x8x8xf32> -> vector<8x8x8xf32>
    "tpu.trace_stop"() : () -> ()
    %97 = vector.shape_cast %4 : vector<8x8xf32> to vector<1x8x8xf32>
    %98 = vector.broadcast %97 : vector<1x8x8xf32> to vector<8x8x8xf32>
    %99 = arith.addf %96, %98 : vector<8x8x8xf32>
    %cst_22 = arith.constant dense<0xFF800000> : vector<8x8xf32>
    %100 = vector.multi_reduction <maximumf>, %99, %cst_22 [2] : vector<8x8x8xf32> to vector<8x8xf32>
    %101 = vector.shape_cast %100 : vector<8x8xf32> to vector<8x8x1xf32>
    %102 = vector.broadcast %101 : vector<8x8x1xf32> to vector<8x8x8xf32>
    %103 = arith.subf %99, %102 : vector<8x8x8xf32>
    %104 = math.exp %103 : vector<8x8x8xf32>
    %cst_23 = arith.constant dense<0.000000e+00> : vector<8x8xf32>
    %105 = vector.multi_reduction <add>, %104, %cst_23 [2] : vector<8x8x8xf32> to vector<8x8xf32>
    %106 = vector.shape_cast %105 : vector<8x8xf32> to vector<8x8x1xf32>
    %107 = tpu.reciprocal %106 {approx = true} : vector<8x8x1xf32> -> vector<8x8x1xf32>
    %108 = vector.broadcast %107 : vector<8x8x1xf32> to vector<8x8x8xf32>
    %109 = arith.mulf %104, %108 : vector<8x8x8xf32>
    %110 = arith.truncf %109 : vector<8x8x8xf32> to vector<8x8x8xbf16>
    "tpu.trace_start"() <{level = 10 : i32, message = "nqk,nkd->nqd"}> : () -> ()
    %cst_24 = arith.constant dense<0.000000e+00> : vector<8x8x8xf32>
    %111 = tpu.matmul %110, %95, %cst_24 {dimension_numbers = #tpu.dot_dimension_numbers<[2], [1], [1], [2], [0, 0, 0, 1, 1, 2], [0], [0]>} : vector<8x8x8xbf16>, vector<8x8x8xbf16>, vector<8x8x8xf32> -> vector<8x8x8xf32>
    "tpu.trace_stop"() : () -> ()
    %112 = vector.extract_strided_slice %111 {offsets = [0, 0, 0], sizes = [1, 8, 8], strides = [1, 1, 1]} : vector<8x8x8xf32> to vector<1x8x8xf32>
    %113 = vector.shape_cast %112 : vector<1x8x8xf32> to vector<8x8xf32>
    %114 = vector.extract_strided_slice %111 {offsets = [1, 0, 0], sizes = [1, 8, 8], strides = [1, 1, 1]} : vector<8x8x8xf32> to vector<1x8x8xf32>
    %115 = vector.shape_cast %114 : vector<1x8x8xf32> to vector<8x8xf32>
    %116 = vector.extract_strided_slice %111 {offsets = [2, 0, 0], sizes = [1, 8, 8], strides = [1, 1, 1]} : vector<8x8x8xf32> to vector<1x8x8xf32>
    %117 = vector.shape_cast %116 : vector<1x8x8xf32> to vector<8x8xf32>
    %118 = vector.extract_strided_slice %111 {offsets = [3, 0, 0], sizes = [1, 8, 8], strides = [1, 1, 1]} : vector<8x8x8xf32> to vector<1x8x8xf32>
    %119 = vector.shape_cast %118 : vector<1x8x8xf32> to vector<8x8xf32>
    %120 = tpu.concatenate %113, %115, %117, %119 in 1 : vector<8x8xf32>, vector<8x8xf32>, vector<8x8xf32>, vector<8x8xf32> -> vector<8x32xf32>
    %121 = vector.extract_strided_slice %111 {offsets = [4, 0, 0], sizes = [1, 8, 8], strides = [1, 1, 1]} : vector<8x8x8xf32> to vector<1x8x8xf32>
    %122 = vector.shape_cast %121 : vector<1x8x8xf32> to vector<8x8xf32>
    %123 = vector.extract_strided_slice %111 {offsets = [5, 0, 0], sizes = [1, 8, 8], strides = [1, 1, 1]} : vector<8x8x8xf32> to vector<1x8x8xf32>
    %124 = vector.shape_cast %123 : vector<1x8x8xf32> to vector<8x8xf32>
    %125 = vector.extract_strided_slice %111 {offsets = [6, 0, 0], sizes = [1, 8, 8], strides = [1, 1, 1]} : vector<8x8x8xf32> to vector<1x8x8xf32>
    %126 = vector.shape_cast %125 : vector<1x8x8xf32> to vector<8x8xf32>
    %127 = vector.extract_strided_slice %111 {offsets = [7, 0, 0], sizes = [1, 8, 8], strides = [1, 1, 1]} : vector<8x8x8xf32> to vector<1x8x8xf32>
    %128 = vector.shape_cast %127 : vector<1x8x8xf32> to vector<8x8xf32>
    %129 = tpu.concatenate %122, %124, %126, %128 in 1 : vector<8x8xf32>, vector<8x8xf32>, vector<8x8xf32>, vector<8x8xf32> -> vector<8x32xf32>
    %130 = tpu.concatenate %120, %129 in 0 : vector<8x32xf32>, vector<8x32xf32> -> vector<16x32xf32>
    %131 = arith.truncf %130 : vector<16x32xf32> to vector<16x32xbf16>
    %c0_25 = arith.constant 0 : index
    %c0_26 = arith.constant 0 : index
    %c0_27 = arith.constant 0 : index
    %132 = vector.load %arg6[%c0_25, %c0_26, %c0_27] : memref<1x32x32xbf16, #tpu.memory_space<vmem>>, vector<1x32x32xbf16>
    %133 = vector.shape_cast %132 : vector<1x32x32xbf16> to vector<32x32xbf16>
    %cst_28 = arith.constant dense<0.000000e+00> : vector<16x32xf32>
    %134 = tpu.matmul %131, %133, %cst_28 {dimension_numbers = #tpu.dot_dimension_numbers<[1], [0], [0], [1], [0, 0, 1, 1], [], []>} : vector<16x32xbf16>, vector<32x32xbf16>, vector<16x32xf32> -> vector<16x32xf32>
    %c0_29 = arith.constant 0 : index
    %c0_30 = arith.constant 0 : index
    %c0_31 = arith.constant 0 : index
    %135 = vector.load %arg7[%c0_29, %c0_30, %c0_31] : memref<1x1x32xf32, #tpu.memory_space<vmem>>, vector<1x1x32xf32>
    %136 = vector.shape_cast %135 : vector<1x1x32xf32> to vector<1x32xf32>
    %137 = vector.broadcast %136 : vector<1x32xf32> to vector<16x32xf32>
    %138 = arith.addf %134, %137 : vector<16x32xf32>
    %139 = arith.addf %3, %138 : vector<16x32xf32>
    %c0_32 = arith.constant 0 : index
    %c0_33 = arith.constant 0 : index
    %c0_34 = arith.constant 0 : index
    %140 = vector.load %arg14[%c0_32, %c0_33, %c0_34] : memref<1x1x32xf32, #tpu.memory_space<vmem>>, vector<1x1x32xf32>
    %141 = vector.shape_cast %140 : vector<1x1x32xf32> to vector<1x32xf32>
    %c0_35 = arith.constant 0 : index
    %c0_36 = arith.constant 0 : index
    %c0_37 = arith.constant 0 : index
    %142 = vector.load %arg15[%c0_35, %c0_36, %c0_37] : memref<1x1x32xf32, #tpu.memory_space<vmem>>, vector<1x1x32xf32>
    %143 = vector.shape_cast %142 : vector<1x1x32xf32> to vector<1x32xf32>
    %cst_38 = arith.constant dense<0.000000e+00> : vector<16xf32>
    %144 = vector.multi_reduction <add>, %139, %cst_38 [1] : vector<16x32xf32> to vector<16xf32>
    %145 = vector.shape_cast %144 : vector<16xf32> to vector<16x1xf32>
    %cst_39 = arith.constant 3.200000e+01 : f32
    %146 = vector.broadcast %cst_39 : f32 to vector<16x1xf32>
    %147 = arith.divf %145, %146 : vector<16x1xf32>
    %148 = vector.broadcast %147 : vector<16x1xf32> to vector<16x32xf32>
    %149 = arith.subf %139, %148 : vector<16x32xf32>
    %150 = arith.mulf %149, %149 : vector<16x32xf32>
    %cst_40 = arith.constant dense<0.000000e+00> : vector<16xf32>
    %151 = vector.multi_reduction <add>, %150, %cst_40 [1] : vector<16x32xf32> to vector<16xf32>
    %152 = vector.shape_cast %151 : vector<16xf32> to vector<16x1xf32>
    %cst_41 = arith.constant 3.200000e+01 : f32
    %153 = vector.broadcast %cst_41 : f32 to vector<16x1xf32>
    %154 = arith.divf %152, %153 : vector<16x1xf32>
    %155 = vector.broadcast %147 : vector<16x1xf32> to vector<16x32xf32>
    %156 = arith.subf %139, %155 : vector<16x32xf32>
    %cst_42 = arith.constant 9.99999974E-6 : f32
    %157 = vector.broadcast %cst_42 : f32 to vector<16x1xf32>
    %158 = arith.addf %154, %157 : vector<16x1xf32>
    %159 = math.rsqrt %158 : vector<16x1xf32>
    %160 = vector.broadcast %159 : vector<16x1xf32> to vector<16x32xf32>
    %161 = arith.mulf %156, %160 : vector<16x32xf32>
    %162 = vector.broadcast %141 : vector<1x32xf32> to vector<16x32xf32>
    %163 = arith.mulf %161, %162 : vector<16x32xf32>
    %164 = vector.broadcast %143 : vector<1x32xf32> to vector<16x32xf32>
    %165 = arith.addf %163, %164 : vector<16x32xf32>
    %166 = arith.truncf %165 : vector<16x32xf32> to vector<16x32xbf16>
    %c0_43 = arith.constant 0 : index
    %c0_44 = arith.constant 0 : index
    %c0_45 = arith.constant 0 : index
    %167 = vector.load %arg8[%c0_43, %c0_44, %c0_45] : memref<1x32x64xbf16, #tpu.memory_space<vmem>>, vector<1x32x64xbf16>
    %168 = vector.shape_cast %167 : vector<1x32x64xbf16> to vector<32x64xbf16>
    %cst_46 = arith.constant dense<0.000000e+00> : vector<16x64xf32>
    %169 = tpu.matmul %166, %168, %cst_46 {dimension_numbers = #tpu.dot_dimension_numbers<[1], [0], [0], [1], [0, 0, 1, 1], [], []>} : vector<16x32xbf16>, vector<32x64xbf16>, vector<16x64xf32> -> vector<16x64xf32>
    %c0_47 = arith.constant 0 : index
    %c0_48 = arith.constant 0 : index
    %c0_49 = arith.constant 0 : index
    %170 = vector.load %arg9[%c0_47, %c0_48, %c0_49] : memref<1x1x64xf32, #tpu.memory_space<vmem>>, vector<1x1x64xf32>
    %171 = vector.shape_cast %170 : vector<1x1x64xf32> to vector<1x64xf32>
    %172 = vector.broadcast %171 : vector<1x64xf32> to vector<16x64xf32>
    %173 = arith.addf %169, %172 : vector<16x64xf32>
    %cst_50 = arith.constant 0.000000e+00 : f32
    %174 = vector.broadcast %cst_50 : f32 to vector<16x64xf32>
    %175 = arith.maximumf %173, %174 : vector<16x64xf32>
    %176 = arith.truncf %175 : vector<16x64xf32> to vector<16x64xbf16>
    %c0_51 = arith.constant 0 : index
    %c0_52 = arith.constant 0 : index
    %c0_53 = arith.constant 0 : index
    %177 = vector.load %arg10[%c0_51, %c0_52, %c0_53] : memref<1x64x32xbf16, #tpu.memory_space<vmem>>, vector<1x64x32xbf16>
    %178 = vector.shape_cast %177 : vector<1x64x32xbf16> to vector<64x32xbf16>
    %cst_54 = arith.constant dense<0.000000e+00> : vector<16x32xf32>
    %179 = tpu.matmul %176, %178, %cst_54 {dimension_numbers = #tpu.dot_dimension_numbers<[1], [0], [0], [1], [0, 0, 1, 1], [], []>} : vector<16x64xbf16>, vector<64x32xbf16>, vector<16x32xf32> -> vector<16x32xf32>
    %c0_55 = arith.constant 0 : index
    %c0_56 = arith.constant 0 : index
    %c0_57 = arith.constant 0 : index
    %180 = vector.load %arg11[%c0_55, %c0_56, %c0_57] : memref<1x1x32xf32, #tpu.memory_space<vmem>>, vector<1x1x32xf32>
    %181 = vector.shape_cast %180 : vector<1x1x32xf32> to vector<1x32xf32>
    %182 = vector.broadcast %181 : vector<1x32xf32> to vector<16x32xf32>
    %183 = arith.addf %179, %182 : vector<16x32xf32>
    %184 = arith.addf %139, %183 : vector<16x32xf32>
    %c0_58 = arith.constant 0 : index
    %c0_59 = arith.constant 0 : index
    %185 = vector.load %arg19[%c0_58, %c0_59] : memref<16x32xf32, #tpu.memory_space<vmem>>, vector<16x32xf32>
    tpu.vector_store %arg19[%c0_58, %c0_59], %184 {strides = array<i32>} : memref<16x32xf32, #tpu.memory_space<vmem>>, vector<16x32xf32>,
    %c1_i32 = arith.constant 1 : i32
    %186 = arith.cmpi eq, %arg1, %c1_i32 : i32
    %187 = arith.extui %186 : i1 to i32
    %c0_i32_60 = arith.constant 0 : i32
    %188 = arith.cmpi ne, %187, %c0_i32_60 : i32
    scf.if %188 {
      %c0_61 = arith.constant 0 : index
      %c0_62 = arith.constant 0 : index
      %189 = vector.load %arg16[%c0_61, %c0_62] : memref<1x32xf32, #tpu.memory_space<vmem>>, vector<1x32xf32>
      %c0_63 = arith.constant 0 : index
      %c0_64 = arith.constant 0 : index
      %190 = vector.load %arg17[%c0_63, %c0_64] : memref<1x32xf32, #tpu.memory_space<vmem>>, vector<1x32xf32>
      %cst_65 = arith.constant dense<0.000000e+00> : vector<16xf32>
      %191 = vector.multi_reduction <add>, %184, %cst_65 [1] : vector<16x32xf32> to vector<16xf32>
      %192 = vector.shape_cast %191 : vector<16xf32> to vector<16x1xf32>
      %cst_66 = arith.constant 3.200000e+01 : f32
      %193 = vector.broadcast %cst_66 : f32 to vector<16x1xf32>
      %194 = arith.divf %192, %193 : vector<16x1xf32>
      %195 = vector.broadcast %194 : vector<16x1xf32> to vector<16x32xf32>
      %196 = arith.subf %184, %195 : vector<16x32xf32>
      %197 = arith.mulf %196, %196 : vector<16x32xf32>
      %cst_67 = arith.constant dense<0.000000e+00> : vector<16xf32>
      %198 = vector.multi_reduction <add>, %197, %cst_67 [1] : vector<16x32xf32> to vector<16xf32>
      %199 = vector.shape_cast %198 : vector<16xf32> to vector<16x1xf32>
      %cst_68 = arith.constant 3.200000e+01 : f32
      %200 = vector.broadcast %cst_68 : f32 to vector<16x1xf32>
      %201 = arith.divf %199, %200 : vector<16x1xf32>
      %202 = vector.broadcast %194 : vector<16x1xf32> to vector<16x32xf32>
      %203 = arith.subf %184, %202 : vector<16x32xf32>
      %cst_69 = arith.constant 9.99999974E-6 : f32
      %204 = vector.broadcast %cst_69 : f32 to vector<16x1xf32>
      %205 = arith.addf %201, %204 : vector<16x1xf32>
      %206 = math.rsqrt %205 : vector<16x1xf32>
      %207 = vector.broadcast %206 : vector<16x1xf32> to vector<16x32xf32>
      %208 = arith.mulf %203, %207 : vector<16x32xf32>
      %209 = vector.broadcast %189 : vector<1x32xf32> to vector<16x32xf32>
      %210 = arith.mulf %208, %209 : vector<16x32xf32>
      %211 = vector.broadcast %190 : vector<1x32xf32> to vector<16x32xf32>
      %212 = arith.addf %210, %211 : vector<16x32xf32>
      %c0_70 = arith.constant 0 : index
      %c0_71 = arith.constant 0 : index
      %213 = vector.load %arg18[%c0_70, %c0_71] : memref<16x32xf32, #tpu.memory_space<vmem>>, vector<16x32xf32>
      tpu.vector_store %arg18[%c0_70, %c0_71], %212 {strides = array<i32>} : memref<16x32xf32, #tpu.memory_space<vmem>>, vector<16x32xf32>,
    } else {
    }
    return
  }
  func.func @transform_0(%arg0: i32, %arg1: i32) -> (i32, i32) {
    %c0_i32 = arith.constant 0 : i32
    %c0_i32_0 = arith.constant 0 : i32
    return %arg0, %c0_i32 : i32, i32
  }
  func.func @transform_1(%arg0: i32, %arg1: i32) -> (i32, i32) {
    %c0_i32 = arith.constant 0 : i32
    %c0_i32_0 = arith.constant 0 : i32
    %c0_i32_1 = arith.constant 0 : i32
    return %c0_i32, %c0_i32_0 : i32, i32
  }
  func.func @transform_2(%arg0: i32, %arg1: i32) -> (i32, i32, i32) {
    %c0_i32 = arith.constant 0 : i32
    %c0_i32_0 = arith.constant 0 : i32
    %c0_i32_1 = arith.constant 0 : i32
    return %arg1, %c0_i32, %c0_i32_0 : i32, i32, i32
  }
  func.func @transform_3(%arg0: i32, %arg1: i32) -> (i32, i32, i32) {
    %c0_i32 = arith.constant 0 : i32
    %c0_i32_0 = arith.constant 0 : i32
    %c0_i32_1 = arith.constant 0 : i32
    return %arg1, %c0_i32, %c0_i32_0 : i32, i32, i32
  }
  func.func @transform_4(%arg0: i32, %arg1: i32) -> (i32, i32, i32) {
    %c0_i32 = arith.constant 0 : i32
    %c0_i32_0 = arith.constant 0 : i32
    %c0_i32_1 = arith.constant 0 : i32
    return %arg1, %c0_i32, %c0_i32_0 : i32, i32, i32
  }
  func.func @transform_5(%arg0: i32, %arg1: i32) -> (i32, i32, i32) {
    %c0_i32 = arith.constant 0 : i32
    %c0_i32_0 = arith.constant 0 : i32
    %c0_i32_1 = arith.constant 0 : i32
    return %arg1, %c0_i32, %c0_i32_0 : i32, i32, i32
  }
  func.func @transform_6(%arg0: i32, %arg1: i32) -> (i32, i32, i32) {
    %c0_i32 = arith.constant 0 : i32
    %c0_i32_0 = arith.constant 0 : i32
    %c0_i32_1 = arith.constant 0 : i32
    return %arg1, %c0_i32, %c0_i32_0 : i32, i32, i32
  }
  func.func @transform_7(%arg0: i32, %arg1: i32) -> (i32, i32, i32) {
    %c0_i32 = arith.constant 0 : i32
    %c0_i32_0 = arith.constant 0 : i32
    %c0_i32_1 = arith.constant 0 : i32
    return %arg1, %c0_i32, %c0_i32_0 : i32, i32, i32
  }
  func.func @transform_8(%arg0: i32, %arg1: i32) -> (i32, i32, i32) {
    %c0_i32 = arith.constant 0 : i32
    %c0_i32_0 = arith.constant 0 : i32
    %c0_i32_1 = arith.constant 0 : i32
    return %arg1, %c0_i32, %c0_i32_0 : i32, i32, i32
  }
  func.func @transform_9(%arg0: i32, %arg1: i32) -> (i32, i32, i32) {
    %c0_i32 = arith.constant 0 : i32
    %c0_i32_0 = arith.constant 0 : i32
    %c0_i32_1 = arith.constant 0 : i32
    return %arg1, %c0_i32, %c0_i32_0 : i32, i32, i32
  }
  func.func @transform_10(%arg0: i32, %arg1: i32) -> (i32, i32, i32) {
    %c0_i32 = arith.constant 0 : i32
    %c0_i32_0 = arith.constant 0 : i32
    %c0_i32_1 = arith.constant 0 : i32
    return %arg1, %c0_i32, %c0_i32_0 : i32, i32, i32
  }
  func.func @transform_11(%arg0: i32, %arg1: i32) -> (i32, i32, i32) {
    %c0_i32 = arith.constant 0 : i32
    %c0_i32_0 = arith.constant 0 : i32
    %c0_i32_1 = arith.constant 0 : i32
    return %arg1, %c0_i32, %c0_i32_0 : i32, i32, i32
  }
  func.func @transform_12(%arg0: i32, %arg1: i32) -> (i32, i32, i32) {
    %c0_i32 = arith.constant 0 : i32
    %c0_i32_0 = arith.constant 0 : i32
    %c0_i32_1 = arith.constant 0 : i32
    return %arg1, %c0_i32, %c0_i32_0 : i32, i32, i32
  }
  func.func @transform_13(%arg0: i32, %arg1: i32) -> (i32, i32, i32) {
    %c0_i32 = arith.constant 0 : i32
    %c0_i32_0 = arith.constant 0 : i32
    %c0_i32_1 = arith.constant 0 : i32
    return %arg1, %c0_i32, %c0_i32_0 : i32, i32, i32
  }
  func.func @transform_14(%arg0: i32, %arg1: i32) -> (i32, i32) {
    %c0_i32 = arith.constant 0 : i32
    %c0_i32_0 = arith.constant 0 : i32
    %c0_i32_1 = arith.constant 0 : i32
    return %c0_i32, %c0_i32_0 : i32, i32
  }
  func.func @transform_15(%arg0: i32, %arg1: i32) -> (i32, i32) {
    %c0_i32 = arith.constant 0 : i32
    %c0_i32_0 = arith.constant 0 : i32
    %c0_i32_1 = arith.constant 0 : i32
    return %c0_i32, %c0_i32_0 : i32, i32
  }
  func.func @transform_16(%arg0: i32, %arg1: i32) -> (i32, i32) {
    %c0_i32 = arith.constant 0 : i32
    %c0_i32_0 = arith.constant 0 : i32
    return %arg0, %c0_i32 : i32, i32
  }
}

</mosaic_0001>

<llo_original>
// kernel: tpu_custom_call.1
$region0: #{tpu_custom_call.1}
  #allocation0 [shape = 'u32[]', space=smem, size = 0x4, offset = 0x4, fixed_abs, tag = 'smem constant byte address 0x4 - core index']
  #allocation1 [shape = 'u32[144,128]{1,0:T(1,128)}', space=vmem, size = 0x12000, scoped, tag = 'internal scratch']
  #allocation2 [shape = 'f32[16,32]{1,0:T(8,128)}', space=vmem, size = 0x2000, scoped, tag = 'scratch operand']
  %s0 = inlined_call_operand.hbm [shape: f32[16,32], index: 0, kind: input, shape index: {}]
  %s1 = inlined_call_operand.hbm [shape: f32[8,8], index: 1, kind: input, shape index: {}]
  %s2 = inlined_call_operand.vmem [shape: bf16[2,32,96], index: 2, kind: input, shape index: {}]
  %s3 = inlined_call_operand.vmem [shape: f32[2,1,96], index: 3, kind: input, shape index: {}]
  %s4 = inlined_call_operand.vmem [shape: bf16[2,32,32], index: 4, kind: input, shape index: {}]
  %s5 = inlined_call_operand.vmem [shape: f32[2,1,32], index: 5, kind: input, shape index: {}]
  %s6 = inlined_call_operand.vmem [shape: bf16[2,32,64], index: 6, kind: input, shape index: {}]
  %s7 = inlined_call_operand.vmem [shape: f32[2,1,64], index: 7, kind: input, shape index: {}]
  %s8 = inlined_call_operand.vmem [shape: bf16[2,64,32], index: 8, kind: input, shape index: {}]
  %s9 = inlined_call_operand.vmem [shape: f32[2,1,32], index: 9, kind: input, shape index: {}]
  %s10 = inlined_call_operand.vmem [shape: f32[2,1,32], index: 10, kind: input, shape index: {}]
  %s11 = inlined_call_operand.vmem [shape: f32[2,1,32], index: 11, kind: input, shape index: {}]
  %s12 = inlined_call_operand.vmem [shape: f32[2,1,32], index: 12, kind: input, shape index: {}]
  %s13 = inlined_call_operand.vmem [shape: f32[2,1,32], index: 13, kind: input, shape index: {}]
  %s14 = inlined_call_operand.vmem [shape: f32[1,32], index: 14, kind: input, shape index: {}]
  %s15 = inlined_call_operand.vmem [shape: f32[1,32], index: 15, kind: input, shape index: {}]
  %s16 = inlined_call_operand.hbm [shape: f32[16,32], index: 16, kind: output, shape index: {}]
  %s17 = sld [smem:[#allocation0]]
  $region113: #{tpu_custom_call.1} parent=0
    _
  %s19 = ssub.s32 1, %s17
  %s20 = scalar_select 0, %s19, %s17
  $region1: #{tpu_custom_call.1} parent=0
    #allocation3 [shape = 'u8[8192]{0}', space=vmem, size = 0x2000, scoped, tag = 'input window, operand 0, single buffered']
    #allocation4 [shape = 's32[2]{0}', space=sflag, size = 0x8, scoped, tag = 'scoped memory for tpu_custom_call.1']
    #allocation5 [shape = 's32[2]{0}', space=sflag, size = 0x8, scoped, tag = 'scoped memory for tpu_custom_call.1']
    #allocation6 [shape = 'u8[4096]{0}', space=vmem, size = 0x1000, scoped, tag = 'input window, operand 1, single buffered']
    #allocation7 [shape = 's32[1]{0}', space=sflag, size = 0x4, scoped, tag = 'scoped memory for tpu_custom_call.1']
    #allocation8 [shape = 'u8[8192]{0}', space=vmem, size = 0x2000, scoped, tag = 'output window, operand 0, single buffered']
    %21 = vsyncpa [#allocation4], 0
    %22 = vsyncpa [#allocation7], 0
    %23 = vsyncpa [#allocation5], 0
    loop: start=0, step=1, limit=4
    $region2: #{tpu_custom_call.1} parent=1 // loop_pre_header
      _
    $region3: #{tpu_custom_call.1} parent=1 // loop_header
      %s25 = sphi 0, %s29
      %p26 = scmp.ge.s32.totalorder %s25, 4
      %s32 = sphi 0, %s44
      %s33 = sphi 0, %s40
      %s34 = sphi 0, %s32
      %s35 = sphi 0, %s33
      %s36 = sphi 0, %s34
      %s37 = sphi 0, %s35
      %s47 = sphi 0, %s49
      %s50 = sphi 0, %s47
      %s51 = sphi 0, %s50
      %s67 = sphi 0, %s51
      %s71 = sphi 0, %s71
      %s73 = sphi 0, %s71
      %s74 = sphi 0, %s73
      %s88 = sphi 0, %s74
      %s94 = sphi 0, %s96
      %s97 = sphi 0, %s94
      %s98 = sphi 0, %s97
      %s114 = sphi 0, %s98
      %s120 = sphi 0, %s122
      %s123 = sphi 0, %s120
      %s124 = sphi 0, %s123
      %s140 = sphi 0, %s124
      %s146 = sphi 0, %s148
      %s149 = sphi 0, %s146
      %s150 = sphi 0, %s149
      %s166 = sphi 0, %s150
      %s172 = sphi 0, %s174
      %s175 = sphi 0, %s172
      %s176 = sphi 0, %s175
      %s192 = sphi 0, %s176
      %s198 = sphi 0, %s200
      %s201 = sphi 0, %s198
      %s202 = sphi 0, %s201
      %s218 = sphi 0, %s202
      %s224 = sphi 0, %s226
      %s227 = sphi 0, %s224
      %s228 = sphi 0, %s227
      %s244 = sphi 0, %s228
      %s250 = sphi 0, %s252
      %s253 = sphi 0, %s250
      %s254 = sphi 0, %s253
      %s270 = sphi 0, %s254
      %s276 = sphi 0, %s278
      %s279 = sphi 0, %s276
      %s280 = sphi 0, %s279
      %s296 = sphi 0, %s280
      %s302 = sphi 0, %s304
      %s305 = sphi 0, %s302
      %s306 = sphi 0, %s305
      %s322 = sphi 0, %s306
      %s328 = sphi 0, %s330
      %s331 = sphi 0, %s328
      %s332 = sphi 0, %s331
      %s348 = sphi 0, %s332
      %s354 = sphi 0, %s356
      %s357 = sphi 0, %s354
      %s358 = sphi 0, %s357
      %s374 = sphi 0, %s358
      %s380 = sphi 0, %s382
      %s383 = sphi 0, %s380
      %s384 = sphi 0, %s383
      %s400 = sphi 0, %s384
      %s404 = sphi 0, %s404
      %s406 = sphi 0, %s404
      %s407 = sphi 0, %s406
      %s421 = sphi 0, %s407
      %s425 = sphi 0, %s425
      %s427 = sphi 0, %s425
      %s428 = sphi 0, %s427
      %s442 = sphi 0, %s428
      %s448 = sphi 0, %s450
      %s451 = sphi 0, %s448
      %s452 = sphi 0, %s451
      %s468 = sphi 0, %s452
    $region4: #{tpu_custom_call.1} parent=1 // loop_header_branch
      %28 = sbr.rel (%p26) target = $region8
    $region5: #{tpu_custom_call.1} parent=1 // loop_body
      %s30 = ssub.s32 %s25, 1
      %s31 = ssub.s32 %s25, 2
      %s38 = sadd.s32 1, %s33
      %p39 = scmp.ge.s32.totalorder %s38, 2
      %s40 = scalar_select %p39, 0, %s38
      %s41 = sadd.s32 1, %s32
      %s42 = scalar_select %p39, %s41, %s32
      %p43 = scmp.ge.s32.totalorder %s42, 1
      %s44 = scalar_select %p43, 0, %s42
      %s45 = ssub.s32 %s32, %s44
      %p46 = scmp.eq.s32.totalorder %s45, 0
      %s48 = sadd.s32 %s47, 1
      %s49 = scalar_select %p46, %s47, %s48
      %p52 = pneg %p46
      %p53 = scmp.eq.s32.totalorder %s25, 1
      %p54 = por %p52, %p53
      %p55 = scmp.ne.s32.totalorder %s47, %s50
      %p56 = scmp.eq.s32.totalorder %s25, 0
      %p57 = por %p55, %p56
      %p58 = scmp.ne.s32.totalorder %s47, %s50
      %p59 = scmp.eq.s32.totalorder %s30, 1
      %p60 = por %p58, %p59
      %p61 = scmp.ne.s32.totalorder %s50, %s51
      %p62 = scmp.eq.s32.totalorder %s30, 0
      %p63 = por %p61, %p62
      %p64 = scmp.ne.s32.totalorder %s50, %s51
      %p65 = scmp.eq.s32.totalorder %s31, 1
      %p66 = por %p64, %p65
      %p68 = scmp.ne.s32.totalorder %s51, %s67
      %p69 = scmp.eq.s32.totalorder %s31, 0
      %p70 = por %p68, %p69
      %s72 = sadd.s32 %s71, 1
      %p75 = scmp.eq.s32.totalorder %s25, 1
      %p76 = scmp.ne.s32.totalorder %s71, %s73
      %p77 = scmp.eq.s32.totalorder %s25, 0
      %p78 = por %p76, %p77
      %p79 = scmp.ne.s32.totalorder %s71, %s73
      %p80 = scmp.eq.s32.totalorder %s30, 1
      %p81 = por %p79, %p80
      %p82 = scmp.ne.s32.totalorder %s73, %s74
      %p83 = scmp.eq.s32.totalorder %s30, 0
      %p84 = por %p82, %p83
      %p85 = scmp.ne.s32.totalorder %s73, %s74
      %p86 = scmp.eq.s32.totalorder %s31, 1
      %p87 = por %p85, %p86
      %p89 = scmp.ne.s32.totalorder %s74, %s88
      %p90 = scmp.eq.s32.totalorder %s31, 0
      %p91 = por %p89, %p90
      %s92 = ssub.s32 %s33, %s40
      %p93 = scmp.eq.s32.totalorder %s92, 0
      %s95 = sadd.s32 %s94, 1
      %s96 = scalar_select %p93, %s94, %s95
      %p99 = pneg %p93
      %p100 = scmp.eq.s32.totalorder %s25, 1
      %p101 = por %p99, %p100
      %p102 = scmp.ne.s32.totalorder %s94, %s97
      %p103 = scmp.eq.s32.totalorder %s25, 0
      %p104 = por %p102, %p103
      %p105 = scmp.ne.s32.totalorder %s94, %s97
      %p106 = scmp.eq.s32.totalorder %s30, 1
      %p107 = por %p105, %p106
      %p108 = scmp.ne.s32.totalorder %s97, %s98
      %p109 = scmp.eq.s32.totalorder %s30, 0
      %p110 = por %p108, %p109
      %p111 = scmp.ne.s32.totalorder %s97, %s98
      %p112 = scmp.eq.s32.totalorder %s31, 1
      %p113 = por %p111, %p112
      %p115 = scmp.ne.s32.totalorder %s98, %s114
      %p116 = scmp.eq.s32.totalorder %s31, 0
      %p117 = por %p115, %p116
      %s118 = ssub.s32 %s33, %s40
      %p119 = scmp.eq.s32.totalorder %s118, 0
      %s121 = sadd.s32 %s120, 1
      %s122 = scalar_select %p119, %s120, %s121
      %p125 = pneg %p119
      %p126 = scmp.eq.s32.totalorder %s25, 1
      %p127 = por %p125, %p126
      %p128 = scmp.ne.s32.totalorder %s120, %s123
      %p129 = scmp.eq.s32.totalorder %s25, 0
      %p130 = por %p128, %p129
      %p131 = scmp.ne.s32.totalorder %s120, %s123
      %p132 = scmp.eq.s32.totalorder %s30, 1
      %p133 = por %p131, %p132
      %p134 = scmp.ne.s32.totalorder %s123, %s124
      %p135 = scmp.eq.s32.totalorder %s30, 0
      %p136 = por %p134, %p135
      %p137 = scmp.ne.s32.totalorder %s123, %s124
      %p138 = scmp.eq.s32.totalorder %s31, 1
      %p139 = por %p137, %p138
      %p141 = scmp.ne.s32.totalorder %s124, %s140
      %p142 = scmp.eq.s32.totalorder %s31, 0
      %p143 = por %p141, %p142
      %s144 = ssub.s32 %s33, %s40
      %p145 = scmp.eq.s32.totalorder %s144, 0
      %s147 = sadd.s32 %s146, 1
      %s148 = scalar_select %p145, %s146, %s147
      %p151 = pneg %p145
      %p152 = scmp.eq.s32.totalorder %s25, 1
      %p153 = por %p151, %p152
      %p154 = scmp.ne.s32.totalorder %s146, %s149
      %p155 = scmp.eq.s32.totalorder %s25, 0
      %p156 = por %p154, %p155
      %p157 = scmp.ne.s32.totalorder %s146, %s149
      %p158 = scmp.eq.s32.totalorder %s30, 1
      %p159 = por %p157, %p158
      %p160 = scmp.ne.s32.totalorder %s149, %s150
      %p161 = scmp.eq.s32.totalorder %s30, 0
      %p162 = por %p160, %p161
      %p163 = scmp.ne.s32.totalorder %s149, %s150
      %p164 = scmp.eq.s32.totalorder %s31, 1
      %p165 = por %p163, %p164
      %p167 = scmp.ne.s32.totalorder %s150, %s166
      %p168 = scmp.eq.s32.totalorder %s31, 0
      %p169 = por %p167, %p168
      %s170 = ssub.s32 %s33, %s40
      %p171 = scmp.eq.s32.totalorder %s170, 0
      %s173 = sadd.s32 %s172, 1
      %s174 = scalar_select %p171, %s172, %s173
      %p177 = pneg %p171
      %p178 = scmp.eq.s32.totalorder %s25, 1
      %p179 = por %p177, %p178
      %p180 = scmp.ne.s32.totalorder %s172, %s175
      %p181 = scmp.eq.s32.totalorder %s25, 0
      %p182 = por %p180, %p181
      %p183 = scmp.ne.s32.totalorder %s172, %s175
      %p184 = scmp.eq.s32.totalorder %s30, 1
      %p185 = por %p183, %p184
      %p186 = scmp.ne.s32.totalorder %s175, %s176
      %p187 = scmp.eq.s32.totalorder %s30, 0
      %p188 = por %p186, %p187
      %p189 = scmp.ne.s32.totalorder %s175, %s176
      %p190 = scmp.eq.s32.totalorder %s31, 1
      %p191 = por %p189, %p190
      %p193 = scmp.ne.s32.totalorder %s176, %s192
      %p194 = scmp.eq.s32.totalorder %s31, 0
      %p195 = por %p193, %p194
      %s196 = ssub.s32 %s33, %s40
      %p197 = scmp.eq.s32.totalorder %s196, 0
      %s199 = sadd.s32 %s198, 1
      %s200 = scalar_select %p197, %s198, %s199
      %p203 = pneg %p197
      %p204 = scmp.eq.s32.totalorder %s25, 1
      %p205 = por %p203, %p204
      %p206 = scmp.ne.s32.totalorder %s198, %s201
      %p207 = scmp.eq.s32.totalorder %s25, 0
      %p208 = por %p206, %p207
      %p209 = scmp.ne.s32.totalorder %s198, %s201
      %p210 = scmp.eq.s32.totalorder %s30, 1
      %p211 = por %p209, %p210
      %p212 = scmp.ne.s32.totalorder %s201, %s202
      %p213 = scmp.eq.s32.totalorder %s30, 0
      %p214 = por %p212, %p213
      %p215 = scmp.ne.s32.totalorder %s201, %s202
      %p216 = scmp.eq.s32.totalorder %s31, 1
      %p217 = por %p215, %p216
      %p219 = scmp.ne.s32.totalorder %s202, %s218
      %p220 = scmp.eq.s32.totalorder %s31, 0
      %p221 = por %p219, %p220
      %s222 = ssub.s32 %s33, %s40
      %p223 = scmp.eq.s32.totalorder %s222, 0
      %s225 = sadd.s32 %s224, 1
      %s226 = scalar_select %p223, %s224, %s225
      %p229 = pneg %p223
      %p230 = scmp.eq.s32.totalorder %s25, 1
      %p231 = por %p229, %p230
      %p232 = scmp.ne.s32.totalorder %s224, %s227
      %p233 = scmp.eq.s32.totalorder %s25, 0
      %p234 = por %p232, %p233
      %p235 = scmp.ne.s32.totalorder %s224, %s227
      %p236 = scmp.eq.s32.totalorder %s30, 1
      %p237 = por %p235, %p236
      %p238 = scmp.ne.s32.totalorder %s227, %s228
      %p239 = scmp.eq.s32.totalorder %s30, 0
      %p240 = por %p238, %p239
      %p241 = scmp.ne.s32.totalorder %s227, %s228
      %p242 = scmp.eq.s32.totalorder %s31, 1
      %p243 = por %p241, %p242
      %p245 = scmp.ne.s32.totalorder %s228, %s244
      %p246 = scmp.eq.s32.totalorder %s31, 0
      %p247 = por %p245, %p246
      %s248 = ssub.s32 %s33, %s40
      %p249 = scmp.eq.s32.totalorder %s248, 0
      %s251 = sadd.s32 %s250, 1
      %s252 = scalar_select %p249, %s250, %s251
      %p255 = pneg %p249
      %p256 = scmp.eq.s32.totalorder %s25, 1
      %p257 = por %p255, %p256
      %p258 = scmp.ne.s32.totalorder %s250, %s253
      %p259 = scmp.eq.s32.totalorder %s25, 0
      %p260 = por %p258, %p259
      %p261 = scmp.ne.s32.totalorder %s250, %s253
      %p262 = scmp.eq.s32.totalorder %s30, 1
      %p263 = por %p261, %p262
      %p264 = scmp.ne.s32.totalorder %s253, %s254
      %p265 = scmp.eq.s32.totalorder %s30, 0
      %p266 = por %p264, %p265
      %p267 = scmp.ne.s32.totalorder %s253, %s254
      %p268 = scmp.eq.s32.totalorder %s31, 1
      %p269 = por %p267, %p268
      %p271 = scmp.ne.s32.totalorder %s254, %s270
      %p272 = scmp.eq.s32.totalorder %s31, 0
      %p273 = por %p271, %p272
      %s274 = ssub.s32 %s33, %s40
      %p275 = scmp.eq.s32.totalorder %s274, 0
      %s277 = sadd.s32 %s276, 1
      %s278 = scalar_select %p275, %s276, %s277
      %p281 = pneg %p275
      %p282 = scmp.eq.s32.totalorder %s25, 1
      %p283 = por %p281, %p282
      %p284 = scmp.ne.s32.totalorder %s276, %s279
      %p285 = scmp.eq.s32.totalorder %s25, 0
      %p286 = por %p284, %p285
      %p287 = scmp.ne.s32.totalorder %s276, %s279
      %p288 = scmp.eq.s32.totalorder %s30, 1
      %p289 = por %p287, %p288
      %p290 = scmp.ne.s32.totalorder %s279, %s280
      %p291 = scmp.eq.s32.totalorder %s30, 0
      %p292 = por %p290, %p291
      %p293 = scmp.ne.s32.totalorder %s279, %s280
      %p294 = scmp.eq.s32.totalorder %s31, 1
      %p295 = por %p293, %p294
      %p297 = scmp.ne.s32.totalorder %s280, %s296
      %p298 = scmp.eq.s32.totalorder %s31, 0
      %p299 = por %p297, %p298
      %s300 = ssub.s32 %s33, %s40
      %p301 = scmp.eq.s32.totalorder %s300, 0
      %s303 = sadd.s32 %s302, 1
      %s304 = scalar_select %p301, %s302, %s303
      %p307 = pneg %p301
      %p308 = scmp.eq.s32.totalorder %s25, 1
      %p309 = por %p307, %p308
      %p310 = scmp.ne.s32.totalorder %s302, %s305
      %p311 = scmp.eq.s32.totalorder %s25, 0
      %p312 = por %p310, %p311
      %p313 = scmp.ne.s32.totalorder %s302, %s305
      %p314 = scmp.eq.s32.totalorder %s30, 1
      %p315 = por %p313, %p314
      %p316 = scmp.ne.s32.totalorder %s305, %s306
      %p317 = scmp.eq.s32.totalorder %s30, 0
      %p318 = por %p316, %p317
      %p319 = scmp.ne.s32.totalorder %s305, %s306
      %p320 = scmp.eq.s32.totalorder %s31, 1
      %p321 = por %p319, %p320
      %p323 = scmp.ne.s32.totalorder %s306, %s322
      %p324 = scmp.eq.s32.totalorder %s31, 0
      %p325 = por %p323, %p324
      %s326 = ssub.s32 %s33, %s40
      %p327 = scmp.eq.s32.totalorder %s326, 0
      %s329 = sadd.s32 %s328, 1
      %s330 = scalar_select %p327, %s328, %s329
      %p333 = pneg %p327
      %p334 = scmp.eq.s32.totalorder %s25, 1
      %p335 = por %p333, %p334
      %p336 = scmp.ne.s32.totalorder %s328, %s331
      %p337 = scmp.eq.s32.totalorder %s25, 0
      %p338 = por %p336, %p337
      %p339 = scmp.ne.s32.totalorder %s328, %s331
      %p340 = scmp.eq.s32.totalorder %s30, 1
      %p341 = por %p339, %p340
      %p342 = scmp.ne.s32.totalorder %s331, %s332
      %p343 = scmp.eq.s32.totalorder %s30, 0
      %p344 = por %p342, %p343
      %p345 = scmp.ne.s32.totalorder %s331, %s332
      %p346 = scmp.eq.s32.totalorder %s31, 1
      %p347 = por %p345, %p346
      %p349 = scmp.ne.s32.totalorder %s332, %s348
      %p350 = scmp.eq.s32.totalorder %s31, 0
      %p351 = por %p349, %p350
      %s352 = ssub.s32 %s33, %s40
      %p353 = scmp.eq.s32.totalorder %s352, 0
      %s355 = sadd.s32 %s354, 1
      %s356 = scalar_select %p353, %s354, %s355
      %p359 = pneg %p353
      %p360 = scmp.eq.s32.totalorder %s25, 1
      %p361 = por %p359, %p360
      %p362 = scmp.ne.s32.totalorder %s354, %s357
      %p363 = scmp.eq.s32.totalorder %s25, 0
      %p364 = por %p362, %p363
      %p365 = scmp.ne.s32.totalorder %s354, %s357
      %p366 = scmp.eq.s32.totalorder %s30, 1
      %p367 = por %p365, %p366
      %p368 = scmp.ne.s32.totalorder %s357, %s358
      %p369 = scmp.eq.s32.totalorder %s30, 0
      %p370 = por %p368, %p369
      %p371 = scmp.ne.s32.totalorder %s357, %s358
      %p372 = scmp.eq.s32.totalorder %s31, 1
      %p373 = por %p371, %p372
      %p375 = scmp.ne.s32.totalorder %s358, %s374
      %p376 = scmp.eq.s32.totalorder %s31, 0
      %p377 = por %p375, %p376
      %s378 = ssub.s32 %s33, %s40
      %p379 = scmp.eq.s32.totalorder %s378, 0
      %s381 = sadd.s32 %s380, 1
      %s382 = scalar_select %p379, %s380, %s381
      %p385 = pneg %p379
      %p386 = scmp.eq.s32.totalorder %s25, 1
      %p387 = por %p385, %p386
      %p388 = scmp.ne.s32.totalorder %s380, %s383
      %p389 = scmp.eq.s32.totalorder %s25, 0
      %p390 = por %p388, %p389
      %p391 = scmp.ne.s32.totalorder %s380, %s383
      %p392 = scmp.eq.s32.totalorder %s30, 1
      %p393 = por %p391, %p392
      %p394 = scmp.ne.s32.totalorder %s383, %s384
      %p395 = scmp.eq.s32.totalorder %s30, 0
      %p396 = por %p394, %p395
      %p397 = scmp.ne.s32.totalorder %s383, %s384
      %p398 = scmp.eq.s32.totalorder %s31, 1
      %p399 = por %p397, %p398
      %p401 = scmp.ne.s32.totalorder %s384, %s400
      %p402 = scmp.eq.s32.totalorder %s31, 0
      %p403 = por %p401, %p402
      %s405 = sadd.s32 %s404, 1
      %p408 = scmp.eq.s32.totalorder %s25, 1
      %p409 = scmp.ne.s32.totalorder %s404, %s406
      %p410 = scmp.eq.s32.totalorder %s25, 0
      %p411 = por %p409, %p410
      %p412 = scmp.ne.s32.totalorder %s404, %s406
      %p413 = scmp.eq.s32.totalorder %s30, 1
      %p414 = por %p412, %p413
      %p415 = scmp.ne.s32.totalorder %s406, %s407
      %p416 = scmp.eq.s32.totalorder %s30, 0
      %p417 = por %p415, %p416
      %p418 = scmp.ne.s32.totalorder %s406, %s407
      %p419 = scmp.eq.s32.totalorder %s31, 1
      %p420 = por %p418, %p419
      %p422 = scmp.ne.s32.totalorder %s407, %s421
      %p423 = scmp.eq.s32.totalorder %s31, 0
      %p424 = por %p422, %p423
      %s426 = sadd.s32 %s425, 1
      %p429 = scmp.eq.s32.totalorder %s25, 1
      %p430 = scmp.ne.s32.totalorder %s425, %s427
      %p431 = scmp.eq.s32.totalorder %s25, 0
      %p432 = por %p430, %p431
      %p433 = scmp.ne.s32.totalorder %s425, %s427
      %p434 = scmp.eq.s32.totalorder %s30, 1
      %p435 = por %p433, %p434
      %p436 = scmp.ne.s32.totalorder %s427, %s428
      %p437 = scmp.eq.s32.totalorder %s30, 0
      %p438 = por %p436, %p437
      %p439 = scmp.ne.s32.totalorder %s427, %s428
      %p440 = scmp.eq.s32.totalorder %s31, 1
      %p441 = por %p439, %p440
      %p443 = scmp.ne.s32.totalorder %s428, %s442
      %p444 = scmp.eq.s32.totalorder %s31, 0
      %p445 = por %p443, %p444
      %s446 = ssub.s32 %s32, %s44
      %p447 = scmp.eq.s32.totalorder %s446, 0
      %s449 = sadd.s32 %s448, 1
      %s450 = scalar_select %p447, %s448, %s449
      %p453 = pneg %p447
      %p454 = scmp.eq.s32.totalorder %s25, 1
      %p455 = por %p453, %p454
      %p456 = scmp.ne.s32.totalorder %s448, %s451
      %p457 = scmp.eq.s32.totalorder %s25, 0
      %p458 = por %p456, %p457
      %p459 = scmp.ne.s32.totalorder %s448, %s451
      %p460 = scmp.eq.s32.totalorder %s30, 1
      %p461 = por %p459, %p460
      %p462 = scmp.ne.s32.totalorder %s451, %s452
      %p463 = scmp.eq.s32.totalorder %s30, 0
      %p464 = por %p462, %p463
      %p465 = scmp.ne.s32.totalorder %s451, %s452
      %p466 = scmp.eq.s32.totalorder %s31, 1
      %p467 = por %p465, %p466
      %p469 = scmp.ne.s32.totalorder %s452, %s468
      %p470 = scmp.eq.s32.totalorder %s31, 0
      %p471 = por %p469, %p470
      %p472 = scmp.le.s32.totalorder 1, %s25
      %p473 = scmp.lt.s32.totalorder %s25, 3
      %p474 = pnand %p472, %p473
      %p475 = pneg %p474
      // Predicated region
      $region9: #{tpu_custom_call.1} parent=5 // pred_check
        _
      $region10: #{tpu_custom_call.1} parent=5 // pred_check_branch
        %477 = sbr.rel (%p474) target = $region12
      $region11: #{tpu_custom_call.1} parent=5 // pred_region
        %s478 = ssub.s32 %s25, 1
        // Predicated region
        $region13: #{tpu_custom_call.1} parent=11 // pred_check
          %p479 = pneg %p63
        $region14: #{tpu_custom_call.1} parent=11 // pred_check_branch
          %481 = sbr.rel (%p479) target = $region16
        $region15: #{tpu_custom_call.1} parent=11 // pred_region
          %s482 = smul.u32 2, %s34
          %s484 = ssub.s32 256, 256
          %485 = vsyncadd [#allocation4], %s484
          %s486 = smul.addr %s482, 128
          %s487 = scalar_lea.hbm %s0, %s486
          %s488 = sshll.u32 [#allocation3], 4
          %s489 = int_to_ptr.vmem [resolvable:$true] %s488
          %494 = dma.hbm_to_vmem [thread:$0]  %s487, 256, %s489, [#allocation4], 128, 128, 8
        $region16: #{tpu_custom_call.1} parent=11 // pred_fallthru
          _
        // Predicated region
        $region17: #{tpu_custom_call.1} parent=11 // pred_check
          %p495 = pneg %p84
        $region18: #{tpu_custom_call.1} parent=11 // pred_check_branch
          %497 = sbr.rel (%p495) target = $region20
        $region19: #{tpu_custom_call.1} parent=11 // pred_region
          %s499 = ssub.s32 128, 128
          %500 = vsyncadd [#allocation7], %s499
          %s502 = sshll.u32 [#allocation6], 4
          %s503 = int_to_ptr.vmem [resolvable:$true] %s502
          %505 = dma.hbm_to_vmem [thread:$0]  %s1, 128, %s503, [#allocation7]
        $region20: #{tpu_custom_call.1} parent=11 // pred_fallthru
          _
        // Predicated region
        $region21: #{tpu_custom_call.1} parent=11 // pred_check
          %p506 = pneg %p417
        $region22: #{tpu_custom_call.1} parent=11 // pred_check_branch
          %508 = sbr.rel (%p506) target = $region24
        $region23: #{tpu_custom_call.1} parent=11 // pred_region
          _
        $region24: #{tpu_custom_call.1} parent=11 // pred_fallthru
          _
        // Predicated region
        $region25: #{tpu_custom_call.1} parent=11 // pred_check
          %p509 = pneg %p438
        $region26: #{tpu_custom_call.1} parent=11 // pred_check_branch
          %511 = sbr.rel (%p509) target = $region28
        $region27: #{tpu_custom_call.1} parent=11 // pred_region
          _
        $region28: #{tpu_custom_call.1} parent=11 // pred_fallthru
          _
      $region12: #{tpu_custom_call.1} parent=5 // pred_fallthru
        _
      %p512 = scmp.lt.s32.totalorder %s25, 2
      // Predicated region
      $region29: #{tpu_custom_call.1} parent=5 // pred_check
        %p513 = pneg %p512
      $region30: #{tpu_custom_call.1} parent=5 // pred_check_branch
        %515 = sbr.rel (%p513) target = $region32
      $region31: #{tpu_custom_call.1} parent=5 // pred_region
        // Predicated region
        $region33: #{tpu_custom_call.1} parent=31 // pred_check
          %p516 = pneg %p104
        $region34: #{tpu_custom_call.1} parent=31 // pred_check_branch
          %518 = sbr.rel (%p516) target = $region36
        $region35: #{tpu_custom_call.1} parent=31 // pred_region
          %p519 = scmp.lt.s32.totalorder %s33, 1
          %s520 = scalar_select %p519, %s33, 1
          %s521 = smul.addr %s520, 4
          %s522 = smul.addr %s521, 4
          %s523 = scalar_lea.vmem %s2, %s522
        $region36: #{tpu_custom_call.1} parent=31 // pred_fallthru
          _
        // Predicated region
        $region37: #{tpu_custom_call.1} parent=31 // pred_check
          %p524 = pneg %p130
        $region38: #{tpu_custom_call.1} parent=31 // pred_check_branch
          %526 = sbr.rel (%p524) target = $region40
        $region39: #{tpu_custom_call.1} parent=31 // pred_region
          %p527 = scmp.lt.s32.totalorder %s33, 1
          %s528 = scalar_select %p527, %s33, 1
          %s529 = scalar_lea.vmem %s3, %s528
        $region40: #{tpu_custom_call.1} parent=31 // pred_fallthru
          _
        // Predicated region
        $region41: #{tpu_custom_call.1} parent=31 // pred_check
          %p530 = pneg %p156
        $region42: #{tpu_custom_call.1} parent=31 // pred_check_branch
          %532 = sbr.rel (%p530) target = $region44
        $region43: #{tpu_custom_call.1} parent=31 // pred_region
          %p533 = scmp.lt.s32.totalorder %s33, 1
          %s534 = scalar_select %p533, %s33, 1
          %s535 = smul.addr %s534, 4
          %s536 = smul.addr %s535, 4
          %s537 = scalar_lea.vmem %s4, %s536
        $region44: #{tpu_custom_call.1} parent=31 // pred_fallthru
          _
        // Predicated region
        $region45: #{tpu_custom_call.1} parent=31 // pred_check
          %p538 = pneg %p182
        $region46: #{tpu_custom_call.1} parent=31 // pred_check_branch
          %540 = sbr.rel (%p538) target = $region48
        $region47: #{tpu_custom_call.1} parent=31 // pred_region
          %p541 = scmp.lt.s32.totalorder %s33, 1
          %s542 = scalar_select %p541, %s33, 1
          %s543 = scalar_lea.vmem %s5, %s542
        $region48: #{tpu_custom_call.1} parent=31 // pred_fallthru
          _
        // Predicated region
        $region49: #{tpu_custom_call.1} parent=31 // pred_check
          %p544 = pneg %p208
        $region50: #{tpu_custom_call.1} parent=31 // pred_check_branch
          %546 = sbr.rel (%p544) target = $region52
        $region51: #{tpu_custom_call.1} parent=31 // pred_region
          %p547 = scmp.lt.s32.totalorder %s33, 1
          %s548 = scalar_select %p547, %s33, 1
          %s549 = smul.addr %s548, 4
          %s550 = smul.addr %s549, 4
          %s551 = scalar_lea.vmem %s6, %s550
        $region52: #{tpu_custom_call.1} parent=31 // pred_fallthru
          _
        // Predicated region
        $region53: #{tpu_custom_call.1} parent=31 // pred_check
          %p552 = pneg %p234
        $region54: #{tpu_custom_call.1} parent=31 // pred_check_branch
          %554 = sbr.rel (%p552) target = $region56
        $region55: #{tpu_custom_call.1} parent=31 // pred_region
          %p555 = scmp.lt.s32.totalorder %s33, 1
          %s556 = scalar_select %p555, %s33, 1
          %s557 = scalar_lea.vmem %s7, %s556
        $region56: #{tpu_custom_call.1} parent=31 // pred_fallthru
          _
        // Predicated region
        $region57: #{tpu_custom_call.1} parent=31 // pred_check
          %p558 = pneg %p260
        $region58: #{tpu_custom_call.1} parent=31 // pred_check_branch
          %560 = sbr.rel (%p558) target = $region60
        $region59: #{tpu_custom_call.1} parent=31 // pred_region
          %p561 = scmp.lt.s32.totalorder %s33, 1
          %s562 = scalar_select %p561, %s33, 1
          %s563 = smul.addr %s562, 8
          %s564 = smul.addr %s563, 4
          %s565 = scalar_lea.vmem %s8, %s564
        $region60: #{tpu_custom_call.1} parent=31 // pred_fallthru
          _
        // Predicated region
        $region61: #{tpu_custom_call.1} parent=31 // pred_check
          %p566 = pneg %p286
        $region62: #{tpu_custom_call.1} parent=31 // pred_check_branch
          %568 = sbr.rel (%p566) target = $region64
        $region63: #{tpu_custom_call.1} parent=31 // pred_region
          %p569 = scmp.lt.s32.totalorder %s33, 1
          %s570 = scalar_select %p569, %s33, 1
          %s571 = scalar_lea.vmem %s9, %s570
        $region64: #{tpu_custom_call.1} parent=31 // pred_fallthru
          _
        // Predicated region
        $region65: #{tpu_custom_call.1} parent=31 // pred_check
          %p572 = pneg %p312
        $region66: #{tpu_custom_call.1} parent=31 // pred_check_branch
          %574 = sbr.rel (%p572) target = $region68
        $region67: #{tpu_custom_call.1} parent=31 // pred_region
          %p575 = scmp.lt.s32.totalorder %s33, 1
          %s576 = scalar_select %p575, %s33, 1
          %s577 = scalar_lea.vmem %s10, %s576
        $region68: #{tpu_custom_call.1} parent=31 // pred_fallthru
          _
        // Predicated region
        $region69: #{tpu_custom_call.1} parent=31 // pred_check
          %p578 = pneg %p338
        $region70: #{tpu_custom_call.1} parent=31 // pred_check_branch
          %580 = sbr.rel (%p578) target = $region72
        $region71: #{tpu_custom_call.1} parent=31 // pred_region
          %p581 = scmp.lt.s32.totalorder %s33, 1
          %s582 = scalar_select %p581, %s33, 1
          %s583 = scalar_lea.vmem %s11, %s582
        $region72: #{tpu_custom_call.1} parent=31 // pred_fallthru
          _
        // Predicated region
        $region73: #{tpu_custom_call.1} parent=31 // pred_check
          %p584 = pneg %p364
        $region74: #{tpu_custom_call.1} parent=31 // pred_check_branch
          %586 = sbr.rel (%p584) target = $region76
        $region75: #{tpu_custom_call.1} parent=31 // pred_region
          %p587 = scmp.lt.s32.totalorder %s33, 1
          %s588 = scalar_select %p587, %s33, 1
          %s589 = scalar_lea.vmem %s12, %s588
        $region76: #{tpu_custom_call.1} parent=31 // pred_fallthru
          _
        // Predicated region
        $region77: #{tpu_custom_call.1} parent=31 // pred_check
          %p590 = pneg %p390
        $region78: #{tpu_custom_call.1} parent=31 // pred_check_branch
          %592 = sbr.rel (%p590) target = $region80
        $region79: #{tpu_custom_call.1} parent=31 // pred_region
          %p593 = scmp.lt.s32.totalorder %s33, 1
          %s594 = scalar_select %p593, %s33, 1
          %s595 = scalar_lea.vmem %s13, %s594
        $region80: #{tpu_custom_call.1} parent=31 // pred_fallthru
          _
      $region32: #{tpu_custom_call.1} parent=5 // pred_fallthru
        _
      %p596 = scmp.le.s32.totalorder 1, %s25
      %p597 = scmp.lt.s32.totalorder %s25, 3
      %p598 = pnand %p596, %p597
      %p599 = pneg %p598
      // Predicated region
      $region81: #{tpu_custom_call.1} parent=5 // pred_check
        _
      $region82: #{tpu_custom_call.1} parent=5 // pred_check_branch
        %601 = sbr.rel (%p598) target = $region84
      $region83: #{tpu_custom_call.1} parent=5 // pred_region
        %s602 = ssub.s32 %s25, 1
        // Predicated region
        $region85: #{tpu_custom_call.1} parent=83 // pred_check
          %p603 = pneg %p63
        $region86: #{tpu_custom_call.1} parent=83 // pred_check_branch
          %605 = sbr.rel (%p603) target = $region88
        $region87: #{tpu_custom_call.1} parent=83 // pred_region
          %606 = dma.done [#allocation4], 256
        $region88: #{tpu_custom_call.1} parent=83 // pred_fallthru
          _
        // Predicated region
        $region89: #{tpu_custom_call.1} parent=83 // pred_check
          %p607 = pneg %p84
        $region90: #{tpu_custom_call.1} parent=83 // pred_check_branch
          %609 = sbr.rel (%p607) target = $region92
        $region91: #{tpu_custom_call.1} parent=83 // pred_region
          %610 = dma.done [#allocation7], 128
        $region92: #{tpu_custom_call.1} parent=83 // pred_fallthru
          _
        %p611 = pneg %p63
        %p612 = pneg %p60
        %p613 = pneg %p84
        %p614 = pneg %p81
        %p615 = scmp.lt.s32.totalorder %s35, 1
        %s616 = scalar_select %p615, %s35, 1
        %s617 = smul.addr %s616, 4
        %s618 = smul.addr %s617, 4
        %s619 = scalar_lea.vmem %s2, %s618
        %p620 = pneg %p110
        %p621 = pneg %p107
        %p622 = scmp.lt.s32.totalorder %s35, 1
        %s623 = scalar_select %p622, %s35, 1
        %s624 = scalar_lea.vmem %s3, %s623
        %p625 = pneg %p136
        %p626 = pneg %p133
        %p627 = scmp.lt.s32.totalorder %s35, 1
        %s628 = scalar_select %p627, %s35, 1
        %s629 = smul.addr %s628, 4
        %s630 = smul.addr %s629, 4
        %s631 = scalar_lea.vmem %s4, %s630
        %p632 = pneg %p162
        %p633 = pneg %p159
        %p634 = scmp.lt.s32.totalorder %s35, 1
        %s635 = scalar_select %p634, %s35, 1
        %s636 = scalar_lea.vmem %s5, %s635
        %p637 = pneg %p188
        %p638 = pneg %p185
        %p639 = scmp.lt.s32.totalorder %s35, 1
        %s640 = scalar_select %p639, %s35, 1
        %s641 = smul.addr %s640, 4
        %s642 = smul.addr %s641, 4
        %s643 = scalar_lea.vmem %s6, %s642
        %p644 = pneg %p214
        %p645 = pneg %p211
        %p646 = scmp.lt.s32.totalorder %s35, 1
        %s647 = scalar_select %p646, %s35, 1
        %s648 = scalar_lea.vmem %s7, %s647
        %p649 = pneg %p240
        %p650 = pneg %p237
        %p651 = scmp.lt.s32.totalorder %s35, 1
        %s652 = scalar_select %p651, %s35, 1
        %s653 = smul.addr %s652, 8
        %s654 = smul.addr %s653, 4
        %s655 = scalar_lea.vmem %s8, %s654
        %p656 = pneg %p266
        %p657 = pneg %p263
        %p658 = scmp.lt.s32.totalorder %s35, 1
        %s659 = scalar_select %p658, %s35, 1
        %s660 = scalar_lea.vmem %s9, %s659
        %p661 = pneg %p292
        %p662 = pneg %p289
        %p663 = scmp.lt.s32.totalorder %s35, 1
        %s664 = scalar_select %p663, %s35, 1
        %s665 = scalar_lea.vmem %s10, %s664
        %p666 = pneg %p318
        %p667 = pneg %p315
        %p668 = scmp.lt.s32.totalorder %s35, 1
        %s669 = scalar_select %p668, %s35, 1
        %s670 = scalar_lea.vmem %s11, %s669
        %p671 = pneg %p344
        %p672 = pneg %p341
        %p673 = scmp.lt.s32.totalorder %s35, 1
        %s674 = scalar_select %p673, %s35, 1
        %s675 = scalar_lea.vmem %s12, %s674
        %p676 = pneg %p370
        %p677 = pneg %p367
        %p678 = scmp.lt.s32.totalorder %s35, 1
        %s679 = scalar_select %p678, %s35, 1
        %s680 = scalar_lea.vmem %s13, %s679
        %p681 = pneg %p396
        %p682 = pneg %p393
        %p683 = pneg %p417
        %p684 = pneg %p414
        %p685 = pneg %p438
        %p686 = pneg %p435
        %p687 = pneg %p464
        %p688 = pneg %p461
        %s689 = smul.u32 2, %s34
        %p690 = scmp.lt.s32.totalorder %s35, 1
        %s691 = scalar_select %p690, %s35, 1
        %s692 = smul.addr %s691, 4
        %s693 = smul.addr %s692, 4
        %s694 = scalar_lea.vmem %s2, %s693
        %p695 = scmp.lt.s32.totalorder %s35, 1
        %s696 = scalar_select %p695, %s35, 1
        %s697 = scalar_lea.vmem %s3, %s696
        %p698 = scmp.lt.s32.totalorder %s35, 1
        %s699 = scalar_select %p698, %s35, 1
        %s700 = smul.addr %s699, 4
        %s701 = smul.addr %s700, 4
        %s702 = scalar_lea.vmem %s4, %s701
        %p703 = scmp.lt.s32.totalorder %s35, 1
        %s704 = scalar_select %p703, %s35, 1
        %s705 = scalar_lea.vmem %s5, %s704
        %p706 = scmp.lt.s32.totalorder %s35, 1
        %s707 = scalar_select %p706, %s35, 1
        %s708 = smul.addr %s707, 4
        %s709 = smul.addr %s708, 4
        %s710 = scalar_lea.vmem %s6, %s709
        %p711 = scmp.lt.s32.totalorder %s35, 1
        %s712 = scalar_select %p711, %s35, 1
        %s713 = scalar_lea.vmem %s7, %s712
        %p714 = scmp.lt.s32.totalorder %s35, 1
        %s715 = scalar_select %p714, %s35, 1
        %s716 = smul.addr %s715, 8
        %s717 = smul.addr %s716, 4
        %s718 = scalar_lea.vmem %s8, %s717
        %p719 = scmp.lt.s32.totalorder %s35, 1
        %s720 = scalar_select %p719, %s35, 1
        %s721 = scalar_lea.vmem %s9, %s720
        %p722 = scmp.lt.s32.totalorder %s35, 1
        %s723 = scalar_select %p722, %s35, 1
        %s724 = scalar_lea.vmem %s10, %s723
        %p725 = scmp.lt.s32.totalorder %s35, 1
        %s726 = scalar_select %p725, %s35, 1
        %s727 = scalar_lea.vmem %s11, %s726
        %p728 = scmp.lt.s32.totalorder %s35, 1
        %s729 = scalar_select %p728, %s35, 1
        %s730 = scalar_lea.vmem %s12, %s729
        %p731 = scmp.lt.s32.totalorder %s35, 1
        %s732 = scalar_select %p731, %s35, 1
        %s733 = scalar_lea.vmem %s13, %s732
        %s734 = smul.u32 2, %s34
        %p736 = scmp.eq.s32.totalorder %s35, 0
        // Predicated region
        $region93: #{tpu_custom_call.1} parent=83 // pred_check
          %p737 = pneg %p736
        $region94: #{tpu_custom_call.1} parent=83 // pred_check_branch
          %739 = sbr.rel (%p737) target = $region96
        $region95: #{tpu_custom_call.1} parent=83 // pred_region
          %v740 = vld [vmem:[#allocation3] sm:$0xff]
          %v741 = vld [vmem:[#allocation3 + $0x8] sm:$0xff]
          %vm742 = vcmask 261120
          %743 = vst.msk [vmem:[#allocation2] sm:$0xff] %vm742, %v740
          %744 = vst.msk [vmem:[#allocation2 + $0x8] sm:$0xff] %vm742, %v741
        $region96: #{tpu_custom_call.1} parent=83 // pred_fallthru
          _
        %v745 = vld [vmem:[#allocation2] sm:$0xff]
        %v746 = vld [vmem:[#allocation2 + $0x8] sm:$0xff]
        %v747 = vld [vmem:[#allocation6] sm:$0xff]
        %v748 = vld [vmem:[%s724] sm:$0x1]
        %v749 = vld [vmem:[%s727] sm:$0x1]
        %vm750 = vcmask 261120
        %v751 = vsel %vm750, %v745, 0.0
        %752 = vadd.xlane.f32.xlu0 %v751
        %v753 = vpop.xlane.xlu0 %752
        %v754 = vsel %vm750, %v746, 0.0
        %755 = vadd.xlane.f32.xlu0 %v754
        %v756 = vpop.xlane.xlu0 %755
        %v757 = vrcp.pop 32.0
        %v758 = vmul.f32 %v753, %v757
        %v759 = vmul.f32 %v756, %v757
        %v760 = vsub.f32 %v745, %v758
        %v761 = vsub.f32 %v746, %v759
        %v762 = vmul.f32 %v760, %v760
        %v763 = vmul.f32 %v761, %v761
        %v764 = vsel %vm750, %v762, 0.0
        %765 = vadd.xlane.f32.xlu0 %v764
        %v766 = vpop.xlane.xlu0 %765
        %v767 = vsel %vm750, %v763, 0.0
        %768 = vadd.xlane.f32.xlu0 %v767
        %v769 = vpop.xlane.xlu0 %768
        %v770 = vmul.f32 %v766, %v757
        %v771 = vmul.f32 %v769, %v757
        %v772 = vadd.f32 %v770, 1e-05
        %v773 = vadd.f32 %v771, 1e-05
        %v774 = vrsqrt.pop %v772
        %v775 = vrsqrt.pop %v773
        %v776 = vmul.f32 %v760, %v774
        %v777 = vmul.f32 %v761, %v775
        %v779 = vlaneseq
        %v780 = vshrl.u32 %v779, 7
        %v781 = vsub.s32 0, %v780
        %v782 = vrot.slane %v748, %v781
        %v784 = vmul.f32 %v776, %v782
        %v785 = vmul.f32 %v777, %v782
        %v787 = vlaneseq
        %v788 = vshrl.u32 %v787, 7
        %v789 = vsub.s32 0, %v788
        %v790 = vrot.slane %v749, %v789
        %v792 = vadd.f32 %v784, %v790
        %v793 = vadd.f32 %v785, %v790
        %v794 = vpack.c.bf16 %v793, %v792
        %v795 = vld [vmem:[%s694] sm:$0xf]
        %v796 = vld [vmem:[%s694 + $0x4] sm:$0xf]
        %v797 = vld [vmem:[%s694 + $0x8] sm:$0xf]
        %v798 = vld [vmem:[%s694 + $0xc] sm:$0xf]
        %v799 = vld [vmem:[%s697] sm:$0x1]
        %v801 = vlaneseq
        %v802 = vshrl.u32 %v801, 7
        %v803 = vsub.s32 0, %v802
        %v804 = vrot.slane %v799, %v803
        %v810 = vunpack.c.l.b16 %v795
        %v811 = vunpack.c.l.b16 %v796
        %v812 = vunpack.c.l.b16 %v797
        %v813 = vunpack.c.l.b16 %v798
        %v814 = vpack.c.b16 %v811, %v810
        %v815 = vpack.c.b16 %v813, %v812
        %v819 = vsel %vm750, %v794, 0
        %821 = vmatprep.subr.bf16.mxu0 0
        %822 = vmatpush1.bf16.msra.mxu0 %v814
        %823 = vmatprep.subr.bf16.mxu0 0
        %824 = vmatpush1.bf16.msra.mxu0 %v815
        %825 = vmatprep.subr.bf16.mxu0 0
        %826 = vmatpush1.bf16.msra.mxu0 0
        %827 = vmatprep.subr.bf16.mxu0 0
        %828 = vmatpush1.bf16.msra.mxu0 0
        %829 = vmatprep.subr.bf16.mxu0 0
        %830 = vmatpush1.bf16.msra.mxu0 0
        %831 = vmatprep.subr.bf16.mxu0 0
        %832 = vmatpush1.bf16.msra.mxu0 0
        %833 = vmatprep.subr.bf16.mxu0 0
        %834 = vmatpush1.bf16.msra.mxu0 0
        %835 = vmatprep.subr.bf16.mxu0 0
        %836 = vmatpush1.bf16.msra.mxu0 0
        %837 = vmatprep.subr.bf16.mxu0 0
        %838 = vmatpush1.bf16.msra.mxu0 0
        %839 = vmatprep.subr.bf16.mxu0 0
        %840 = vmatpush1.bf16.msra.mxu0 0
        %841 = vmatprep.subr.bf16.mxu0 0
        %842 = vmatpush1.bf16.msra.mxu0 0
        %843 = vmatprep.subr.bf16.mxu0 0
        %844 = vmatpush1.bf16.msra.mxu0 0
        %845 = vmatprep.subr.bf16.mxu0 0
        %846 = vmatpush1.bf16.msra.mxu0 0
        %847 = vmatprep.subr.bf16.mxu0 0
        %848 = vmatpush1.bf16.msra.mxu0 0
        %849 = vmatprep.subr.bf16.mxu0 0
        %850 = vmatpush1.bf16.msra.mxu0 0
        %851 = vmatprep.subr.bf16.mxu0 0
        %852 = vmatpush1.bf16.msra.mxu0 0
        %853 = vmatprep.mubr.bf16.mxu0 0
        %854 = vmatmul.mubr.bf16.gmra.mrb[0].mxu0 %v819
        %v855 = vpop.f32.mrb[0].mxu0
        %v856 = vadd.f32 %v804, %v855
        %v857 = vpop.f32.mrb[0].mxu0
        %v858 = vpop.f32.mrb[0].mxu0
        %v859 = vadd.f32 %v804, %v858
        %v860 = vpop.f32.mrb[0].mxu0
        %861 = vdwg.mxu0
        %863 = vrot.lane.b32.xlu0 %v856, 120
        %v864 = vpop.permute.xlu0 %863
        %866 = vrot.lane.b32.xlu0 %v856, 112
        %v867 = vpop.permute.xlu0 %866
        %869 = vrot.lane.b32.xlu0 %v856, 104
        %v870 = vpop.permute.xlu0 %869
        %873 = vrot.lane.b32.xlu0 %v859, 120
        %v874 = vpop.permute.xlu0 %873
        %876 = vrot.lane.b32.xlu0 %v859, 112
        %v877 = vpop.permute.xlu0 %876
        %879 = vrot.lane.b32.xlu0 %v859, 104
        %v880 = vpop.permute.xlu0 %879
        %v882 = vpack.c.bf16 %v856, %v856
        %v883 = vpack.c.bf16 %v864, %v864
        %v884 = vpack.c.bf16 %v867, %v867
        %v885 = vpack.c.bf16 %v870, %v870
        %v886 = vpack.c.bf16 %v859, %v859
        %v887 = vpack.c.bf16 %v874, %v874
        %v888 = vpack.c.bf16 %v877, %v877
        %v889 = vpack.c.bf16 %v880, %v880
        %891 = vrot.lane.b32.xlu0 %v882, 96
        %v892 = vpop.permute.xlu0 %891
        %vm893 = vcmask 64512
        %v895 = vsel %vm893, %v882, 0
        %v898 = vsel %vm893, %v892, 0
        %900 = vmatprep.subr.bf16.mxu0 0
        %901 = vmatpush1.bf16.xpose.msra.mxu0 %v898
        %902 = vmatprep.subr.bf16.mxu0 0
        %903 = vmatpush1.bf16.xpose.msra.mxu0 0
        %904 = vmatprep.subr.bf16.mxu0 0
        %905 = vmatpush1.bf16.xpose.msra.mxu0 0
        %906 = vmatprep.subr.bf16.mxu0 0
        %907 = vmatpush1.bf16.xpose.msra.mxu0 0
        %908 = vmatprep.subr.bf16.mxu0 0
        %909 = vmatpush1.bf16.xpose.msra.mxu0 0
        %910 = vmatprep.subr.bf16.mxu0 0
        %911 = vmatpush1.bf16.xpose.msra.mxu0 0
        %912 = vmatprep.subr.bf16.mxu0 0
        %913 = vmatpush1.bf16.xpose.msra.mxu0 0
        %914 = vmatprep.subr.bf16.mxu0 0
        %915 = vmatpush1.bf16.xpose.msra.mxu0 0
        %916 = vmatprep.subr.bf16.mxu0 0
        %917 = vmatpush1.bf16.xpose.msra.mxu0 0
        %918 = vmatprep.subr.bf16.mxu0 0
        %919 = vmatpush1.bf16.xpose.msra.mxu0 0
        %920 = vmatprep.subr.bf16.mxu0 0
        %921 = vmatpush1.bf16.xpose.msra.mxu0 0
        %922 = vmatprep.subr.bf16.mxu0 0
        %923 = vmatpush1.bf16.xpose.msra.mxu0 0
        %924 = vmatprep.subr.bf16.mxu0 0
        %925 = vmatpush1.bf16.xpose.msra.mxu0 0
        %926 = vmatprep.subr.bf16.mxu0 0
        %927 = vmatpush1.bf16.xpose.msra.mxu0 0
        %928 = vmatprep.subr.bf16.mxu0 0
        %929 = vmatpush1.bf16.xpose.msra.mxu0 0
        %930 = vmatprep.subr.bf16.mxu0 0
        %931 = vmatpush1.bf16.xpose.msra.mxu0 0
        %932 = vmatprep.mubr.bf16.mxu0 0
        %933 = vmatmul.mubr.bf16.gmra.mrb[0].mxu0 %v895
        %v934 = vpop.f32.mrb[0].mxu0
        %v935 = vadd.f32 %v747, %v934
        %v936 = vpop.f32.mrb[0].mxu0
        %v937 = vpop.f32.mrb[0].mxu0
        %v938 = vpop.f32.mrb[0].mxu0
        %939 = vdwg.mxu0
        %941 = vrot.lane.b32.xlu0 %v883, 96
        %v942 = vpop.permute.xlu0 %941
        %v944 = vsel %vm893, %v883, 0
        %v947 = vsel %vm893, %v942, 0
        %949 = vmatprep.subr.bf16.mxu0 0
        %950 = vmatpush1.bf16.xpose.msra.mxu0 %v947
        %951 = vmatprep.subr.bf16.mxu0 0
        %952 = vmatpush1.bf16.xpose.msra.mxu0 0
        %953 = vmatprep.subr.bf16.mxu0 0
        %954 = vmatpush1.bf16.xpose.msra.mxu0 0
        %955 = vmatprep.subr.bf16.mxu0 0
        %956 = vmatpush1.bf16.xpose.msra.mxu0 0
        %957 = vmatprep.subr.bf16.mxu0 0
        %958 = vmatpush1.bf16.xpose.msra.mxu0 0
        %959 = vmatprep.subr.bf16.mxu0 0
        %960 = vmatpush1.bf16.xpose.msra.mxu0 0
        %961 = vmatprep.subr.bf16.mxu0 0
        %962 = vmatpush1.bf16.xpose.msra.mxu0 0
        %963 = vmatprep.subr.bf16.mxu0 0
        %964 = vmatpush1.bf16.xpose.msra.mxu0 0
        %965 = vmatprep.subr.bf16.mxu0 0
        %966 = vmatpush1.bf16.xpose.msra.mxu0 0
        %967 = vmatprep.subr.bf16.mxu0 0
        %968 = vmatpush1.bf16.xpose.msra.mxu0 0
        %969 = vmatprep.subr.bf16.mxu0 0
        %970 = vmatpush1.bf16.xpose.msra.mxu0 0
        %971 = vmatprep.subr.bf16.mxu0 0
        %972 = vmatpush1.bf16.xpose.msra.mxu0 0
        %973 = vmatprep.subr.bf16.mxu0 0
        %974 = vmatpush1.bf16.xpose.msra.mxu0 0
        %975 = vmatprep.subr.bf16.mxu0 0
        %976 = vmatpush1.bf16.xpose.msra.mxu0 0
        %977 = vmatprep.subr.bf16.mxu0 0
        %978 = vmatpush1.bf16.xpose.msra.mxu0 0
        %979 = vmatprep.subr.bf16.mxu0 0
        %980 = vmatpush1.bf16.xpose.msra.mxu0 0
        %981 = vmatprep.mubr.bf16.mxu0 0
        %982 = vmatmul.mubr.bf16.gmra.mrb[0].mxu0 %v944
        %v983 = vpop.f32.mrb[0].mxu0
        %v984 = vadd.f32 %v747, %v983
        %v985 = vpop.f32.mrb[0].mxu0
        %v986 = vpop.f32.mrb[0].mxu0
        %v987 = vpop.f32.mrb[0].mxu0
        %988 = vdwg.mxu0
        %990 = vrot.lane.b32.xlu0 %v884, 96
        %v991 = vpop.permute.xlu0 %990
        %v993 = vsel %vm893, %v884, 0
        %v996 = vsel %vm893, %v991, 0
        %998 = vmatprep.subr.bf16.mxu0 0
        %999 = vmatpush1.bf16.xpose.msra.mxu0 %v996
        %1000 = vmatprep.subr.bf16.mxu0 0
        %1001 = vmatpush1.bf16.xpose.msra.mxu0 0
        %1002 = vmatprep.subr.bf16.mxu0 0
        %1003 = vmatpush1.bf16.xpose.msra.mxu0 0
        %1004 = vmatprep.subr.bf16.mxu0 0
        %1005 = vmatpush1.bf16.xpose.msra.mxu0 0
        %1006 = vmatprep.subr.bf16.mxu0 0
        %1007 = vmatpush1.bf16.xpose.msra.mxu0 0
        %1008 = vmatprep.subr.bf16.mxu0 0
        %1009 = vmatpush1.bf16.xpose.msra.mxu0 0
        %1010 = vmatprep.subr.bf16.mxu0 0
        %1011 = vmatpush1.bf16.xpose.msra.mxu0 0
        %1012 = vmatprep.subr.bf16.mxu0 0
        %1013 = vmatpush1.bf16.xpose.msra.mxu0 0
        %1014 = vmatprep.subr.bf16.mxu0 0
        %1015 = vmatpush1.bf16.xpose.msra.mxu0 0
        %1016 = vmatprep.subr.bf16.mxu0 0
        %1017 = vmatpush1.bf16.xpose.msra.mxu0 0
        %1018 = vmatprep.subr.bf16.mxu0 0
        %1019 = vmatpush1.bf16.xpose.msra.mxu0 0
        %1020 = vmatprep.subr.bf16.mxu0 0
        %1021 = vmatpush1.bf16.xpose.msra.mxu0 0
        %1022 = vmatprep.subr.bf16.mxu0 0
        %1023 = vmatpush1.bf16.xpose.msra.mxu0 0
        %1024 = vmatprep.subr.bf16.mxu0 0
        %1025 = vmatpush1.bf16.xpose.msra.mxu0 0
        %1026 = vmatprep.subr.bf16.mxu0 0
        %1027 = vmatpush1.bf16.xpose.msra.mxu0 0
        %1028 = vmatprep.subr.bf16.mxu0 0
        %1029 = vmatpush1.bf16.xpose.msra.mxu0 0
        %1030 = vmatprep.mubr.bf16.mxu0 0
        %1031 = vmatmul.mubr.bf16.gmra.mrb[0].mxu0 %v993
        %v1032 = vpop.f32.mrb[0].mxu0
        %v1033 = vadd.f32 %v747, %v1032
        %v1034 = vpop.f32.mrb[0].mxu0
        %v1035 = vpop.f32.mrb[0].mxu0
        %v1036 = vpop.f32.mrb[0].mxu0
        %1037 = vdwg.mxu0
        %1039 = vrot.lane.b32.xlu0 %v885, 96
        %v1040 = vpop.permute.xlu0 %1039
        %v1042 = vsel %vm893, %v885, 0
        %v1045 = vsel %vm893, %v1040, 0
        %1047 = vmatprep.subr.bf16.mxu0 0
        %1048 = vmatpush1.bf16.xpose.msra.mxu0 %v1045
        %1049 = vmatprep.subr.bf16.mxu0 0
        %1050 = vmatpush1.bf16.xpose.msra.mxu0 0
        %1051 = vmatprep.subr.bf16.mxu0 0
        %1052 = vmatpush1.bf16.xpose.msra.mxu0 0
        %1053 = vmatprep.subr.bf16.mxu0 0
        %1054 = vmatpush1.bf16.xpose.msra.mxu0 0
        %1055 = vmatprep.subr.bf16.mxu0 0
        %1056 = vmatpush1.bf16.xpose.msra.mxu0 0
        %1057 = vmatprep.subr.bf16.mxu0 0
        %1058 = vmatpush1.bf16.xpose.msra.mxu0 0
        %1059 = vmatprep.subr.bf16.mxu0 0
        %1060 = vmatpush1.bf16.xpose.msra.mxu0 0
        %1061 = vmatprep.subr.bf16.mxu0 0
        %1062 = vmatpush1.bf16.xpose.msra.mxu0 0
        %1063 = vmatprep.subr.bf16.mxu0 0
        %1064 = vmatpush1.bf16.xpose.msra.mxu0 0
        %1065 = vmatprep.subr.bf16.mxu0 0
        %1066 = vmatpush1.bf16.xpose.msra.mxu0 0
        %1067 = vmatprep.subr.bf16.mxu0 0
        %1068 = vmatpush1.bf16.xpose.msra.mxu0 0
        %1069 = vmatprep.subr.bf16.mxu0 0
        %1070 = vmatpush1.bf16.xpose.msra.mxu0 0
        %1071 = vmatprep.subr.bf16.mxu0 0
        %1072 = vmatpush1.bf16.xpose.msra.mxu0 0
        %1073 = vmatprep.subr.bf16.mxu0 0
        %1074 = vmatpush1.bf16.xpose.msra.mxu0 0
        %1075 = vmatprep.subr.bf16.mxu0 0
        %1076 = vmatpush1.bf16.xpose.msra.mxu0 0
        %1077 = vmatprep.subr.bf16.mxu0 0
        %1078 = vmatpush1.bf16.xpose.msra.mxu0 0
        %1079 = vmatprep.mubr.bf16.mxu0 0
        %1080 = vmatmul.mubr.bf16.gmra.mrb[0].mxu0 %v1042
        %v1081 = vpop.f32.mrb[0].mxu0
        %v1082 = vadd.f32 %v747, %v1081
        %v1083 = vpop.f32.mrb[0].mxu0
        %v1084 = vpop.f32.mrb[0].mxu0
        %v1085 = vpop.f32.mrb[0].mxu0
        %1086 = vdwg.mxu0
        %1088 = vrot.lane.b32.xlu0 %v886, 96
        %v1089 = vpop.permute.xlu0 %1088
        %v1091 = vsel %vm893, %v886, 0
        %v1094 = vsel %vm893, %v1089, 0
        %1096 = vmatprep.subr.bf16.mxu0 0
        %1097 = vmatpush1.bf16.xpose.msra.mxu0 %v1094
        %1098 = vmatprep.subr.bf16.mxu0 0
        %1099 = vmatpush1.bf16.xpose.msra.mxu0 0
        %1100 = vmatprep.subr.bf16.mxu0 0
        %1101 = vmatpush1.bf16.xpose.msra.mxu0 0
        %1102 = vmatprep.subr.bf16.mxu0 0
        %1103 = vmatpush1.bf16.xpose.msra.mxu0 0
        %1104 = vmatprep.subr.bf16.mxu0 0
        %1105 = vmatpush1.bf16.xpose.msra.mxu0 0
        %1106 = vmatprep.subr.bf16.mxu0 0
        %1107 = vmatpush1.bf16.xpose.msra.mxu0 0
        %1108 = vmatprep.subr.bf16.mxu0 0
        %1109 = vmatpush1.bf16.xpose.msra.mxu0 0
        %1110 = vmatprep.subr.bf16.mxu0 0
        %1111 = vmatpush1.bf16.xpose.msra.mxu0 0
        %1112 = vmatprep.subr.bf16.mxu0 0
        %1113 = vmatpush1.bf16.xpose.msra.mxu0 0
        %1114 = vmatprep.subr.bf16.mxu0 0
        %1115 = vmatpush1.bf16.xpose.msra.mxu0 0
        %1116 = vmatprep.subr.bf16.mxu0 0
        %1117 = vmatpush1.bf16.xpose.msra.mxu0 0
        %1118 = vmatprep.subr.bf16.mxu0 0
        %1119 = vmatpush1.bf16.xpose.msra.mxu0 0
        %1120 = vmatprep.subr.bf16.mxu0 0
        %1121 = vmatpush1.bf16.xpose.msra.mxu0 0
        %1122 = vmatprep.subr.bf16.mxu0 0
        %1123 = vmatpush1.bf16.xpose.msra.mxu0 0
        %1124 = vmatprep.subr.bf16.mxu0 0
        %1125 = vmatpush1.bf16.xpose.msra.mxu0 0
        %1126 = vmatprep.subr.bf16.mxu0 0
        %1127 = vmatpush1.bf16.xpose.msra.mxu0 0
        %1128 = vmatprep.mubr.bf16.mxu0 0
        %1129 = vmatmul.mubr.bf16.gmra.mrb[0].mxu0 %v1091
        %v1130 = vpop.f32.mrb[0].mxu0
        %v1131 = vadd.f32 %v747, %v1130
        %v1132 = vpop.f32.mrb[0].mxu0
        %v1133 = vpop.f32.mrb[0].mxu0
        %v1134 = vpop.f32.mrb[0].mxu0
        %1135 = vdwg.mxu0
        %1137 = vrot.lane.b32.xlu0 %v887, 96
        %v1138 = vpop.permute.xlu0 %1137
        %v1140 = vsel %vm893, %v887, 0
        %v1143 = vsel %vm893, %v1138, 0
        %1145 = vmatprep.subr.bf16.mxu0 0
        %1146 = vmatpush1.bf16.xpose.msra.mxu0 %v1143
        %1147 = vmatprep.subr.bf16.mxu0 0
        %1148 = vmatpush1.bf16.xpose.msra.mxu0 0
        %1149 = vmatprep.subr.bf16.mxu0 0
        %1150 = vmatpush1.bf16.xpose.msra.mxu0 0
        %1151 = vmatprep.subr.bf16.mxu0 0
        %1152 = vmatpush1.bf16.xpose.msra.mxu0 0
        %1153 = vmatprep.subr.bf16.mxu0 0
        %1154 = vmatpush1.bf16.xpose.msra.mxu0 0
        %1155 = vmatprep.subr.bf16.mxu0 0
        %1156 = vmatpush1.bf16.xpose.msra.mxu0 0
        %1157 = vmatprep.subr.bf16.mxu0 0
        %1158 = vmatpush1.bf16.xpose.msra.mxu0 0
        %1159 = vmatprep.subr.bf16.mxu0 0
        %1160 = vmatpush1.bf16.xpose.msra.mxu0 0
        %1161 = vmatprep.subr.bf16.mxu0 0
        %1162 = vmatpush1.bf16.xpose.msra.mxu0 0
        %1163 = vmatprep.subr.bf16.mxu0 0
        %1164 = vmatpush1.bf16.xpose.msra.mxu0 0
        %1165 = vmatprep.subr.bf16.mxu0 0
        %1166 = vmatpush1.bf16.xpose.msra.mxu0 0
        %1167 = vmatprep.subr.bf16.mxu0 0
        %1168 = vmatpush1.bf16.xpose.msra.mxu0 0
        %1169 = vmatprep.subr.bf16.mxu0 0
        %1170 = vmatpush1.bf16.xpose.msra.mxu0 0
        %1171 = vmatprep.subr.bf16.mxu0 0
        %1172 = vmatpush1.bf16.xpose.msra.mxu0 0
        %1173 = vmatprep.subr.bf16.mxu0 0
        %1174 = vmatpush1.bf16.xpose.msra.mxu0 0
        %1175 = vmatprep.subr.bf16.mxu0 0
        %1176 = vmatpush1.bf16.xpose.msra.mxu0 0
        %1177 = vmatprep.mubr.bf16.mxu0 0
        %1178 = vmatmul.mubr.bf16.gmra.mrb[0].mxu0 %v1140
        %v1179 = vpop.f32.mrb[0].mxu0
        %v1180 = vadd.f32 %v747, %v1179
        %v1181 = vpop.f32.mrb[0].mxu0
        %v1182 = vpop.f32.mrb[0].mxu0
        %v1183 = vpop.f32.mrb[0].mxu0
        %1184 = vdwg.mxu0
        %1186 = vrot.lane.b32.xlu0 %v888, 96
        %v1187 = vpop.permute.xlu0 %1186
        %v1189 = vsel %vm893, %v888, 0
        %v1192 = vsel %vm893, %v1187, 0
        %1194 = vmatprep.subr.bf16.mxu0 0
        %1195 = vmatpush1.bf16.xpose.msra.mxu0 %v1192
        %1196 = vmatprep.subr.bf16.mxu0 0
        %1197 = vmatpush1.bf16.xpose.msra.mxu0 0
        %1198 = vmatprep.subr.bf16.mxu0 0
        %1199 = vmatpush1.bf16.xpose.msra.mxu0 0
        %1200 = vmatprep.subr.bf16.mxu0 0
        %1201 = vmatpush1.bf16.xpose.msra.mxu0 0
        %1202 = vmatprep.subr.bf16.mxu0 0
        %1203 = vmatpush1.bf16.xpose.msra.mxu0 0
        %1204 = vmatprep.subr.bf16.mxu0 0
        %1205 = vmatpush1.bf16.xpose.msra.mxu0 0
        %1206 = vmatprep.subr.bf16.mxu0 0
        %1207 = vmatpush1.bf16.xpose.msra.mxu0 0
        %1208 = vmatprep.subr.bf16.mxu0 0
        %1209 = vmatpush1.bf16.xpose.msra.mxu0 0
        %1210 = vmatprep.subr.bf16.mxu0 0
        %1211 = vmatpush1.bf16.xpose.msra.mxu0 0
        %1212 = vmatprep.subr.bf16.mxu0 0
        %1213 = vmatpush1.bf16.xpose.msra.mxu0 0
        %1214 = vmatprep.subr.bf16.mxu0 0
        %1215 = vmatpush1.bf16.xpose.msra.mxu0 0
        %1216 = vmatprep.subr.bf16.mxu0 0
        %1217 = vmatpush1.bf16.xpose.msra.mxu0 0
        %1218 = vmatprep.subr.bf16.mxu0 0
        %1219 = vmatpush1.bf16.xpose.msra.mxu0 0
        %1220 = vmatprep.subr.bf16.mxu0 0
        %1221 = vmatpush1.bf16.xpose.msra.mxu0 0
        %1222 = vmatprep.subr.bf16.mxu0 0
        %1223 = vmatpush1.bf16.xpose.msra.mxu0 0
        %1224 = vmatprep.subr.bf16.mxu0 0
        %1225 = vmatpush1.bf16.xpose.msra.mxu0 0
        %1226 = vmatprep.mubr.bf16.mxu0 0
        %1227 = vmatmul.mubr.bf16.gmra.mrb[0].mxu0 %v1189
        %v1228 = vpop.f32.mrb[0].mxu0
        %v1229 = vadd.f32 %v747, %v1228
        %v1230 = vpop.f32.mrb[0].mxu0
        %v1231 = vpop.f32.mrb[0].mxu0
        %v1232 = vpop.f32.mrb[0].mxu0
        %1233 = vdwg.mxu0
        %1235 = vrot.lane.b32.xlu0 %v889, 96
        %v1236 = vpop.permute.xlu0 %1235
        %v1238 = vsel %vm893, %v889, 0
        %v1241 = vsel %vm893, %v1236, 0
        %1243 = vmatprep.subr.bf16.mxu0 0
        %1244 = vmatpush1.bf16.xpose.msra.mxu0 %v1241
        %1245 = vmatprep.subr.bf16.mxu0 0
        %1246 = vmatpush1.bf16.xpose.msra.mxu0 0
        %1247 = vmatprep.subr.bf16.mxu0 0
        %1248 = vmatpush1.bf16.xpose.msra.mxu0 0
        %1249 = vmatprep.subr.bf16.mxu0 0
        %1250 = vmatpush1.bf16.xpose.msra.mxu0 0
        %1251 = vmatprep.subr.bf16.mxu0 0
        %1252 = vmatpush1.bf16.xpose.msra.mxu0 0
        %1253 = vmatprep.subr.bf16.mxu0 0
        %1254 = vmatpush1.bf16.xpose.msra.mxu0 0
        %1255 = vmatprep.subr.bf16.mxu0 0
        %1256 = vmatpush1.bf16.xpose.msra.mxu0 0
        %1257 = vmatprep.subr.bf16.mxu0 0
        %1258 = vmatpush1.bf16.xpose.msra.mxu0 0
        %1259 = vmatprep.subr.bf16.mxu0 0
        %1260 = vmatpush1.bf16.xpose.msra.mxu0 0
        %1261 = vmatprep.subr.bf16.mxu0 0
        %1262 = vmatpush1.bf16.xpose.msra.mxu0 0
        %1263 = vmatprep.subr.bf16.mxu0 0
        %1264 = vmatpush1.bf16.xpose.msra.mxu0 0
        %1265 = vmatprep.subr.bf16.mxu0 0
        %1266 = vmatpush1.bf16.xpose.msra.mxu0 0
        %1267 = vmatprep.subr.bf16.mxu0 0
        %1268 = vmatpush1.bf16.xpose.msra.mxu0 0
        %1269 = vmatprep.subr.bf16.mxu0 0
        %1270 = vmatpush1.bf16.xpose.msra.mxu0 0
        %1271 = vmatprep.subr.bf16.mxu0 0
        %1272 = vmatpush1.bf16.xpose.msra.mxu0 0
        %1273 = vmatprep.subr.bf16.mxu0 0
        %1274 = vmatpush1.bf16.xpose.msra.mxu0 0
        %1275 = vmatprep.mubr.bf16.mxu0 0
        %1276 = vmatmul.mubr.bf16.gmra.mrb[0].mxu0 %v1238
        %v1277 = vpop.f32.mrb[0].mxu0
        %v1278 = vadd.f32 %v747, %v1277
        %v1279 = vpop.f32.mrb[0].mxu0
        %v1280 = vpop.f32.mrb[0].mxu0
        %v1281 = vpop.f32.mrb[0].mxu0
        %1282 = vdwg.mxu0
        %v1283 = vsel %vm893, %v935, -inf
        %1284 = vmax.xlane.f32.xlu0 %v1283
        %v1285 = vpop.xlane.xlu0 %1284
        %v1286 = vsel %vm893, %v984, -inf
        %1287 = vmax.xlane.f32.xlu0 %v1286
        %v1288 = vpop.xlane.xlu0 %1287
        %v1289 = vsel %vm893, %v1033, -inf
        %1290 = vmax.xlane.f32.xlu0 %v1289
        %v1291 = vpop.xlane.xlu0 %1290
        %v1292 = vsel %vm893, %v1082, -inf
        %1293 = vmax.xlane.f32.xlu0 %v1292
        %v1294 = vpop.xlane.xlu0 %1293
        %v1295 = vsel %vm893, %v1131, -inf
        %1296 = vmax.xlane.f32.xlu0 %v1295
        %v1297 = vpop.xlane.xlu0 %1296
        %v1298 = vsel %vm893, %v1180, -inf
        %1299 = vmax.xlane.f32.xlu0 %v1298
        %v1300 = vpop.xlane.xlu0 %1299
        %v1301 = vsel %vm893, %v1229, -inf
        %1302 = vmax.xlane.f32.xlu0 %v1301
        %v1303 = vpop.xlane.xlu0 %1302
        %v1304 = vsel %vm893, %v1278, -inf
        %1305 = vmax.xlane.f32.xlu0 %v1304
        %v1306 = vpop.xlane.xlu0 %1305
        %v1307 = vsub.f32 %v935, %v1285
        %v1308 = vsub.f32 %v984, %v1288
        %v1309 = vsub.f32 %v1033, %v1291
        %v1310 = vsub.f32 %v1082, %v1294
        %v1311 = vsub.f32 %v1131, %v1297
        %v1312 = vsub.f32 %v1180, %v1300
        %v1313 = vsub.f32 %v1229, %v1303
        %v1314 = vsub.f32 %v1278, %v1306
        %v1315 = vmul.f32 %v1307, 1.442695
        %v1316 = vpow.pop %v1315
        %v1317 = vmul.f32 %v1308, 1.442695
        %v1318 = vpow.pop %v1317
        %v1319 = vmul.f32 %v1309, 1.442695
        %v1320 = vpow.pop %v1319
        %v1321 = vmul.f32 %v1310, 1.442695
        %v1322 = vpow.pop %v1321
        %v1323 = vmul.f32 %v1311, 1.442695
        %v1324 = vpow.pop %v1323
        %v1325 = vmul.f32 %v1312, 1.442695
        %v1326 = vpow.pop %v1325
        %v1327 = vmul.f32 %v1313, 1.442695
        %v1328 = vpow.pop %v1327
        %v1329 = vmul.f32 %v1314, 1.442695
        %v1330 = vpow.pop %v1329
        %v1331 = vsel %vm893, %v1316, 0.0
        %1332 = vadd.xlane.f32.xlu0 %v1331
        %v1333 = vpop.xlane.xlu0 %1332
        %v1334 = vsel %vm893, %v1318, 0.0
        %1335 = vadd.xlane.f32.xlu0 %v1334
        %v1336 = vpop.xlane.xlu0 %1335
        %v1337 = vsel %vm893, %v1320, 0.0
        %1338 = vadd.xlane.f32.xlu0 %v1337
        %v1339 = vpop.xlane.xlu0 %1338
        %v1340 = vsel %vm893, %v1322, 0.0
        %1341 = vadd.xlane.f32.xlu0 %v1340
        %v1342 = vpop.xlane.xlu0 %1341
        %v1343 = vsel %vm893, %v1324, 0.0
        %1344 = vadd.xlane.f32.xlu0 %v1343
        %v1345 = vpop.xlane.xlu0 %1344
        %v1346 = vsel %vm893, %v1326, 0.0
        %1347 = vadd.xlane.f32.xlu0 %v1346
        %v1348 = vpop.xlane.xlu0 %1347
        %v1349 = vsel %vm893, %v1328, 0.0
        %1350 = vadd.xlane.f32.xlu0 %v1349
        %v1351 = vpop.xlane.xlu0 %1350
        %v1352 = vsel %vm893, %v1330, 0.0
        %1353 = vadd.xlane.f32.xlu0 %v1352
        %v1354 = vpop.xlane.xlu0 %1353
        %v1355 = vrcp.pop %v1333
        %v1356 = vrcp.pop %v1336
        %v1357 = vrcp.pop %v1339
        %v1358 = vrcp.pop %v1342
        %v1359 = vrcp.pop %v1345
        %v1360 = vrcp.pop %v1348
        %v1361 = vrcp.pop %v1351
        %v1362 = vrcp.pop %v1354
        %v1363 = vmul.f32 %v1316, %v1355
        %v1364 = vmul.f32 %v1318, %v1356
        %v1365 = vmul.f32 %v1320, %v1357
        %v1366 = vmul.f32 %v1322, %v1358
        %v1367 = vmul.f32 %v1324, %v1359
        %v1368 = vmul.f32 %v1326, %v1360
        %v1369 = vmul.f32 %v1328, %v1361
        %v1370 = vmul.f32 %v1330, %v1362
        %v1371 = vpack.c.bf16 %v1363, %v1363
        %v1372 = vpack.c.bf16 %v1364, %v1364
        %v1373 = vpack.c.bf16 %v1365, %v1365
        %v1374 = vpack.c.bf16 %v1366, %v1366
        %v1375 = vpack.c.bf16 %v1367, %v1367
        %v1376 = vpack.c.bf16 %v1368, %v1368
        %v1377 = vpack.c.bf16 %v1369, %v1369
        %v1378 = vpack.c.bf16 %v1370, %v1370
        %1379 = vrot.lane.b32.xlu0 %v882, 64
        %v1380 = vpop.permute.xlu0 %1379
        %v1382 = vsel %vm893, %v1371, 0
        %vm1384 = vcmask 1043456
        %v1386 = vsel %vm1384, %v1380, 0
        %1388 = vmatprep.subr.bf16.mxu0 0
        %1389 = vmatpush1.bf16.msra.mxu0 %v1386
        %1390 = vmatprep.subr.bf16.mxu0 0
        %1391 = vmatpush1.bf16.msra.mxu0 0
        %1392 = vmatprep.subr.bf16.mxu0 0
        %1393 = vmatpush1.bf16.msra.mxu0 0
        %1394 = vmatprep.subr.bf16.mxu0 0
        %1395 = vmatpush1.bf16.msra.mxu0 0
        %1396 = vmatprep.subr.bf16.mxu0 0
        %1397 = vmatpush1.bf16.msra.mxu0 0
        %1398 = vmatprep.subr.bf16.mxu0 0
        %1399 = vmatpush1.bf16.msra.mxu0 0
        %1400 = vmatprep.subr.bf16.mxu0 0
        %1401 = vmatpush1.bf16.msra.mxu0 0
        %1402 = vmatprep.subr.bf16.mxu0 0
        %1403 = vmatpush1.bf16.msra.mxu0 0
        %1404 = vmatprep.subr.bf16.mxu0 0
        %1405 = vmatpush1.bf16.msra.mxu0 0
        %1406 = vmatprep.subr.bf16.mxu0 0
        %1407 = vmatpush1.bf16.msra.mxu0 0
        %1408 = vmatprep.subr.bf16.mxu0 0
        %1409 = vmatpush1.bf16.msra.mxu0 0
        %1410 = vmatprep.subr.bf16.mxu0 0
        %1411 = vmatpush1.bf16.msra.mxu0 0
        %1412 = vmatprep.subr.bf16.mxu0 0
        %1413 = vmatpush1.bf16.msra.mxu0 0
        %1414 = vmatprep.subr.bf16.mxu0 0
        %1415 = vmatpush1.bf16.msra.mxu0 0
        %1416 = vmatprep.subr.bf16.mxu0 0
        %1417 = vmatpush1.bf16.msra.mxu0 0
        %1418 = vmatprep.subr.bf16.mxu0 0
        %1419 = vmatpush1.bf16.msra.mxu0 0
        %1420 = vmatprep.mubr.bf16.mxu0 0
        %1421 = vmatmul.mubr.bf16.gmra.mrb[0].mxu0 %v1382
        %v1422 = vpop.f32.mrb[0].mxu0
        %v1423 = vadd.f32 0.0, %v1422
        %v1424 = vpop.f32.mrb[0].mxu0
        %v1425 = vpop.f32.mrb[0].mxu0
        %v1426 = vpop.f32.mrb[0].mxu0
        %1427 = vdwg.mxu0
        %1428 = vrot.lane.b32.xlu0 %v883, 64
        %v1429 = vpop.permute.xlu0 %1428
        %v1431 = vsel %vm893, %v1372, 0
        %v1434 = vsel %vm1384, %v1429, 0
        %1436 = vmatprep.subr.bf16.mxu0 0
        %1437 = vmatpush1.bf16.msra.mxu0 %v1434
        %1438 = vmatprep.subr.bf16.mxu0 0
        %1439 = vmatpush1.bf16.msra.mxu0 0
        %1440 = vmatprep.subr.bf16.mxu0 0
        %1441 = vmatpush1.bf16.msra.mxu0 0
        %1442 = vmatprep.subr.bf16.mxu0 0
        %1443 = vmatpush1.bf16.msra.mxu0 0
        %1444 = vmatprep.subr.bf16.mxu0 0
        %1445 = vmatpush1.bf16.msra.mxu0 0
        %1446 = vmatprep.subr.bf16.mxu0 0
        %1447 = vmatpush1.bf16.msra.mxu0 0
        %1448 = vmatprep.subr.bf16.mxu0 0
        %1449 = vmatpush1.bf16.msra.mxu0 0
        %1450 = vmatprep.subr.bf16.mxu0 0
        %1451 = vmatpush1.bf16.msra.mxu0 0
        %1452 = vmatprep.subr.bf16.mxu0 0
        %1453 = vmatpush1.bf16.msra.mxu0 0
        %1454 = vmatprep.subr.bf16.mxu0 0
        %1455 = vmatpush1.bf16.msra.mxu0 0
        %1456 = vmatprep.subr.bf16.mxu0 0
        %1457 = vmatpush1.bf16.msra.mxu0 0
        %1458 = vmatprep.subr.bf16.mxu0 0
        %1459 = vmatpush1.bf16.msra.mxu0 0
        %1460 = vmatprep.subr.bf16.mxu0 0
        %1461 = vmatpush1.bf16.msra.mxu0 0
        %1462 = vmatprep.subr.bf16.mxu0 0
        %1463 = vmatpush1.bf16.msra.mxu0 0
        %1464 = vmatprep.subr.bf16.mxu0 0
        %1465 = vmatpush1.bf16.msra.mxu0 0
        %1466 = vmatprep.subr.bf16.mxu0 0
        %1467 = vmatpush1.bf16.msra.mxu0 0
        %1468 = vmatprep.mubr.bf16.mxu0 0
        %1469 = vmatmul.mubr.bf16.gmra.mrb[0].mxu0 %v1431
        %v1470 = vpop.f32.mrb[0].mxu0
        %v1471 = vadd.f32 0.0, %v1470
        %v1472 = vpop.f32.mrb[0].mxu0
        %v1473 = vpop.f32.mrb[0].mxu0
        %v1474 = vpop.f32.mrb[0].mxu0
        %1475 = vdwg.mxu0
        %1476 = vrot.lane.b32.xlu0 %v884, 64
        %v1477 = vpop.permute.xlu0 %1476
        %v1479 = vsel %vm893, %v1373, 0
        %v1482 = vsel %vm1384, %v1477, 0
        %1484 = vmatprep.subr.bf16.mxu0 0
        %1485 = vmatpush1.bf16.msra.mxu0 %v1482
        %1486 = vmatprep.subr.bf16.mxu0 0
        %1487 = vmatpush1.bf16.msra.mxu0 0
        %1488 = vmatprep.subr.bf16.mxu0 0
        %1489 = vmatpush1.bf16.msra.mxu0 0
        %1490 = vmatprep.subr.bf16.mxu0 0
        %1491 = vmatpush1.bf16.msra.mxu0 0
        %1492 = vmatprep.subr.bf16.mxu0 0
        %1493 = vmatpush1.bf16.msra.mxu0 0
        %1494 = vmatprep.subr.bf16.mxu0 0
        %1495 = vmatpush1.bf16.msra.mxu0 0
        %1496 = vmatprep.subr.bf16.mxu0 0
        %1497 = vmatpush1.bf16.msra.mxu0 0
        %1498 = vmatprep.subr.bf16.mxu0 0
        %1499 = vmatpush1.bf16.msra.mxu0 0
        %1500 = vmatprep.subr.bf16.mxu0 0
        %1501 = vmatpush1.bf16.msra.mxu0 0
        %1502 = vmatprep.subr.bf16.mxu0 0
        %1503 = vmatpush1.bf16.msra.mxu0 0
        %1504 = vmatprep.subr.bf16.mxu0 0
        %1505 = vmatpush1.bf16.msra.mxu0 0
        %1506 = vmatprep.subr.bf16.mxu0 0
        %1507 = vmatpush1.bf16.msra.mxu0 0
        %1508 = vmatprep.subr.bf16.mxu0 0
        %1509 = vmatpush1.bf16.msra.mxu0 0
        %1510 = vmatprep.subr.bf16.mxu0 0
        %1511 = vmatpush1.bf16.msra.mxu0 0
        %1512 = vmatprep.subr.bf16.mxu0 0
        %1513 = vmatpush1.bf16.msra.mxu0 0
        %1514 = vmatprep.subr.bf16.mxu0 0
        %1515 = vmatpush1.bf16.msra.mxu0 0
        %1516 = vmatprep.mubr.bf16.mxu0 0
        %1517 = vmatmul.mubr.bf16.gmra.mrb[0].mxu0 %v1479
        %v1518 = vpop.f32.mrb[0].mxu0
        %v1519 = vadd.f32 0.0, %v1518
        %v1520 = vpop.f32.mrb[0].mxu0
        %v1521 = vpop.f32.mrb[0].mxu0
        %v1522 = vpop.f32.mrb[0].mxu0
        %1523 = vdwg.mxu0
        %1524 = vrot.lane.b32.xlu0 %v885, 64
        %v1525 = vpop.permute.xlu0 %1524
        %v1527 = vsel %vm893, %v1374, 0
        %v1530 = vsel %vm1384, %v1525, 0
        %1532 = vmatprep.subr.bf16.mxu0 0
        %1533 = vmatpush1.bf16.msra.mxu0 %v1530
        %1534 = vmatprep.subr.bf16.mxu0 0
        %1535 = vmatpush1.bf16.msra.mxu0 0
        %1536 = vmatprep.subr.bf16.mxu0 0
        %1537 = vmatpush1.bf16.msra.mxu0 0
        %1538 = vmatprep.subr.bf16.mxu0 0
        %1539 = vmatpush1.bf16.msra.mxu0 0
        %1540 = vmatprep.subr.bf16.mxu0 0
        %1541 = vmatpush1.bf16.msra.mxu0 0
        %1542 = vmatprep.subr.bf16.mxu0 0
        %1543 = vmatpush1.bf16.msra.mxu0 0
        %1544 = vmatprep.subr.bf16.mxu0 0
        %1545 = vmatpush1.bf16.msra.mxu0 0
        %1546 = vmatprep.subr.bf16.mxu0 0
        %1547 = vmatpush1.bf16.msra.mxu0 0
        %1548 = vmatprep.subr.bf16.mxu0 0
        %1549 = vmatpush1.bf16.msra.mxu0 0
        %1550 = vmatprep.subr.bf16.mxu0 0
        %1551 = vmatpush1.bf16.msra.mxu0 0
        %1552 = vmatprep.subr.bf16.mxu0 0
        %1553 = vmatpush1.bf16.msra.mxu0 0
        %1554 = vmatprep.subr.bf16.mxu0 0
        %1555 = vmatpush1.bf16.msra.mxu0 0
        %1556 = vmatprep.subr.bf16.mxu0 0
        %1557 = vmatpush1.bf16.msra.mxu0 0
        %1558 = vmatprep.subr.bf16.mxu0 0
        %1559 = vmatpush1.bf16.msra.mxu0 0
        %1560 = vmatprep.subr.bf16.mxu0 0
        %1561 = vmatpush1.bf16.msra.mxu0 0
        %1562 = vmatprep.subr.bf16.mxu0 0
        %1563 = vmatpush1.bf16.msra.mxu0 0
        %1564 = vmatprep.mubr.bf16.mxu0 0
        %1565 = vmatmul.mubr.bf16.gmra.mrb[0].mxu0 %v1527
        %v1566 = vpop.f32.mrb[0].mxu0
        %v1567 = vadd.f32 0.0, %v1566
        %v1568 = vpop.f32.mrb[0].mxu0
        %v1569 = vpop.f32.mrb[0].mxu0
        %v1570 = vpop.f32.mrb[0].mxu0
        %1571 = vdwg.mxu0
        %1572 = vrot.lane.b32.xlu0 %v886, 64
        %v1573 = vpop.permute.xlu0 %1572
        %v1575 = vsel %vm893, %v1375, 0
        %v1578 = vsel %vm1384, %v1573, 0
        %1580 = vmatprep.subr.bf16.mxu0 0
        %1581 = vmatpush1.bf16.msra.mxu0 %v1578
        %1582 = vmatprep.subr.bf16.mxu0 0
        %1583 = vmatpush1.bf16.msra.mxu0 0
        %1584 = vmatprep.subr.bf16.mxu0 0
        %1585 = vmatpush1.bf16.msra.mxu0 0
        %1586 = vmatprep.subr.bf16.mxu0 0
        %1587 = vmatpush1.bf16.msra.mxu0 0
        %1588 = vmatprep.subr.bf16.mxu0 0
        %1589 = vmatpush1.bf16.msra.mxu0 0
        %1590 = vmatprep.subr.bf16.mxu0 0
        %1591 = vmatpush1.bf16.msra.mxu0 0
        %1592 = vmatprep.subr.bf16.mxu0 0
        %1593 = vmatpush1.bf16.msra.mxu0 0
        %1594 = vmatprep.subr.bf16.mxu0 0
        %1595 = vmatpush1.bf16.msra.mxu0 0
        %1596 = vmatprep.subr.bf16.mxu0 0
        %1597 = vmatpush1.bf16.msra.mxu0 0
        %1598 = vmatprep.subr.bf16.mxu0 0
        %1599 = vmatpush1.bf16.msra.mxu0 0
        %1600 = vmatprep.subr.bf16.mxu0 0
        %1601 = vmatpush1.bf16.msra.mxu0 0
        %1602 = vmatprep.subr.bf16.mxu0 0
        %1603 = vmatpush1.bf16.msra.mxu0 0
        %1604 = vmatprep.subr.bf16.mxu0 0
        %1605 = vmatpush1.bf16.msra.mxu0 0
        %1606 = vmatprep.subr.bf16.mxu0 0
        %1607 = vmatpush1.bf16.msra.mxu0 0
        %1608 = vmatprep.subr.bf16.mxu0 0
        %1609 = vmatpush1.bf16.msra.mxu0 0
        %1610 = vmatprep.subr.bf16.mxu0 0
        %1611 = vmatpush1.bf16.msra.mxu0 0
        %1612 = vmatprep.mubr.bf16.mxu0 0
        %1613 = vmatmul.mubr.bf16.gmra.mrb[0].mxu0 %v1575
        %v1614 = vpop.f32.mrb[0].mxu0
        %v1615 = vadd.f32 0.0, %v1614
        %v1616 = vpop.f32.mrb[0].mxu0
        %v1617 = vpop.f32.mrb[0].mxu0
        %v1618 = vpop.f32.mrb[0].mxu0
        %1619 = vdwg.mxu0
        %1620 = vrot.lane.b32.xlu0 %v887, 64
        %v1621 = vpop.permute.xlu0 %1620
        %v1623 = vsel %vm893, %v1376, 0
        %v1626 = vsel %vm1384, %v1621, 0
        %1628 = vmatprep.subr.bf16.mxu0 0
        %1629 = vmatpush1.bf16.msra.mxu0 %v1626
        %1630 = vmatprep.subr.bf16.mxu0 0
        %1631 = vmatpush1.bf16.msra.mxu0 0
        %1632 = vmatprep.subr.bf16.mxu0 0
        %1633 = vmatpush1.bf16.msra.mxu0 0
        %1634 = vmatprep.subr.bf16.mxu0 0
        %1635 = vmatpush1.bf16.msra.mxu0 0
        %1636 = vmatprep.subr.bf16.mxu0 0
        %1637 = vmatpush1.bf16.msra.mxu0 0
        %1638 = vmatprep.subr.bf16.mxu0 0
        %1639 = vmatpush1.bf16.msra.mxu0 0
        %1640 = vmatprep.subr.bf16.mxu0 0
        %1641 = vmatpush1.bf16.msra.mxu0 0
        %1642 = vmatprep.subr.bf16.mxu0 0
        %1643 = vmatpush1.bf16.msra.mxu0 0
        %1644 = vmatprep.subr.bf16.mxu0 0
        %1645 = vmatpush1.bf16.msra.mxu0 0
        %1646 = vmatprep.subr.bf16.mxu0 0
        %1647 = vmatpush1.bf16.msra.mxu0 0
        %1648 = vmatprep.subr.bf16.mxu0 0
        %1649 = vmatpush1.bf16.msra.mxu0 0
        %1650 = vmatprep.subr.bf16.mxu0 0
        %1651 = vmatpush1.bf16.msra.mxu0 0
        %1652 = vmatprep.subr.bf16.mxu0 0
        %1653 = vmatpush1.bf16.msra.mxu0 0
        %1654 = vmatprep.subr.bf16.mxu0 0
        %1655 = vmatpush1.bf16.msra.mxu0 0
        %1656 = vmatprep.subr.bf16.mxu0 0
        %1657 = vmatpush1.bf16.msra.mxu0 0
        %1658 = vmatprep.subr.bf16.mxu0 0
        %1659 = vmatpush1.bf16.msra.mxu0 0
        %1660 = vmatprep.mubr.bf16.mxu0 0
        %1661 = vmatmul.mubr.bf16.gmra.mrb[0].mxu0 %v1623
        %v1662 = vpop.f32.mrb[0].mxu0
        %v1663 = vadd.f32 0.0, %v1662
        %v1664 = vpop.f32.mrb[0].mxu0
        %v1665 = vpop.f32.mrb[0].mxu0
        %v1666 = vpop.f32.mrb[0].mxu0
        %1667 = vdwg.mxu0
        %1668 = vrot.lane.b32.xlu0 %v888, 64
        %v1669 = vpop.permute.xlu0 %1668
        %v1671 = vsel %vm893, %v1377, 0
        %v1674 = vsel %vm1384, %v1669, 0
        %1676 = vmatprep.subr.bf16.mxu0 0
        %1677 = vmatpush1.bf16.msra.mxu0 %v1674
        %1678 = vmatprep.subr.bf16.mxu0 0
        %1679 = vmatpush1.bf16.msra.mxu0 0
        %1680 = vmatprep.subr.bf16.mxu0 0
        %1681 = vmatpush1.bf16.msra.mxu0 0
        %1682 = vmatprep.subr.bf16.mxu0 0
        %1683 = vmatpush1.bf16.msra.mxu0 0
        %1684 = vmatprep.subr.bf16.mxu0 0
        %1685 = vmatpush1.bf16.msra.mxu0 0
        %1686 = vmatprep.subr.bf16.mxu0 0
        %1687 = vmatpush1.bf16.msra.mxu0 0
        %1688 = vmatprep.subr.bf16.mxu0 0
        %1689 = vmatpush1.bf16.msra.mxu0 0
        %1690 = vmatprep.subr.bf16.mxu0 0
        %1691 = vmatpush1.bf16.msra.mxu0 0
        %1692 = vmatprep.subr.bf16.mxu0 0
        %1693 = vmatpush1.bf16.msra.mxu0 0
        %1694 = vmatprep.subr.bf16.mxu0 0
        %1695 = vmatpush1.bf16.msra.mxu0 0
        %1696 = vmatprep.subr.bf16.mxu0 0
        %1697 = vmatpush1.bf16.msra.mxu0 0
        %1698 = vmatprep.subr.bf16.mxu0 0
        %1699 = vmatpush1.bf16.msra.mxu0 0
        %1700 = vmatprep.subr.bf16.mxu0 0
        %1701 = vmatpush1.bf16.msra.mxu0 0
        %1702 = vmatprep.subr.bf16.mxu0 0
        %1703 = vmatpush1.bf16.msra.mxu0 0
        %1704 = vmatprep.subr.bf16.mxu0 0
        %1705 = vmatpush1.bf16.msra.mxu0 0
        %1706 = vmatprep.subr.bf16.mxu0 0
        %1707 = vmatpush1.bf16.msra.mxu0 0
        %1708 = vmatprep.mubr.bf16.mxu0 0
        %1709 = vmatmul.mubr.bf16.gmra.mrb[0].mxu0 %v1671
        %v1710 = vpop.f32.mrb[0].mxu0
        %v1711 = vadd.f32 0.0, %v1710
        %v1712 = vpop.f32.mrb[0].mxu0
        %v1713 = vpop.f32.mrb[0].mxu0
        %v1714 = vpop.f32.mrb[0].mxu0
        %1715 = vdwg.mxu0
        %1716 = vrot.lane.b32.xlu0 %v889, 64
        %v1717 = vpop.permute.xlu0 %1716
        %v1719 = vsel %vm893, %v1378, 0
        %v1722 = vsel %vm1384, %v1717, 0
        %1724 = vmatprep.subr.bf16.mxu0 0
        %1725 = vmatpush1.bf16.msra.mxu0 %v1722
        %1726 = vmatprep.subr.bf16.mxu0 0
        %1727 = vmatpush1.bf16.msra.mxu0 0
        %1728 = vmatprep.subr.bf16.mxu0 0
        %1729 = vmatpush1.bf16.msra.mxu0 0
        %1730 = vmatprep.subr.bf16.mxu0 0
        %1731 = vmatpush1.bf16.msra.mxu0 0
        %1732 = vmatprep.subr.bf16.mxu0 0
        %1733 = vmatpush1.bf16.msra.mxu0 0
        %1734 = vmatprep.subr.bf16.mxu0 0
        %1735 = vmatpush1.bf16.msra.mxu0 0
        %1736 = vmatprep.subr.bf16.mxu0 0
        %1737 = vmatpush1.bf16.msra.mxu0 0
        %1738 = vmatprep.subr.bf16.mxu0 0
        %1739 = vmatpush1.bf16.msra.mxu0 0
        %1740 = vmatprep.subr.bf16.mxu0 0
        %1741 = vmatpush1.bf16.msra.mxu0 0
        %1742 = vmatprep.subr.bf16.mxu0 0
        %1743 = vmatpush1.bf16.msra.mxu0 0
        %1744 = vmatprep.subr.bf16.mxu0 0
        %1745 = vmatpush1.bf16.msra.mxu0 0
        %1746 = vmatprep.subr.bf16.mxu0 0
        %1747 = vmatpush1.bf16.msra.mxu0 0
        %1748 = vmatprep.subr.bf16.mxu0 0
        %1749 = vmatpush1.bf16.msra.mxu0 0
        %1750 = vmatprep.subr.bf16.mxu0 0
        %1751 = vmatpush1.bf16.msra.mxu0 0
        %1752 = vmatprep.subr.bf16.mxu0 0
        %1753 = vmatpush1.bf16.msra.mxu0 0
        %1754 = vmatprep.subr.bf16.mxu0 0
        %1755 = vmatpush1.bf16.msra.mxu0 0
        %1756 = vmatprep.mubr.bf16.mxu0 0
        %1757 = vmatmul.mubr.bf16.gmra.mrb[0].mxu0 %v1719
        %v1758 = vpop.f32.mrb[0].mxu0
        %v1759 = vadd.f32 0.0, %v1758
        %v1760 = vpop.f32.mrb[0].mxu0
        %v1761 = vpop.f32.mrb[0].mxu0
        %v1762 = vpop.f32.mrb[0].mxu0
        %1763 = vdwg.mxu0
        %1765 = vrot.lane.b32.xlu0 %v1471, 8
        %v1766 = vpop.permute.xlu0 %1765
        %1769 = vrot.lane.b32.xlu0 %v1519, 16
        %v1770 = vpop.permute.xlu0 %1769
        %1773 = vrot.lane.b32.xlu0 %v1567, 24
        %v1774 = vpop.permute.xlu0 %1773
        %v1776 = vsel %vm893, %v1423, %v1766
        %vm1777 = vcmask 130048
        %v1778 = vsel %vm1777, %v1776, %v1770
        %vm1779 = vcmask 195584
        %v1780 = vsel %vm1779, %v1778, %v1774
        %1782 = vrot.lane.b32.xlu0 %v1663, 8
        %v1783 = vpop.permute.xlu0 %1782
        %1786 = vrot.lane.b32.xlu0 %v1711, 16
        %v1787 = vpop.permute.xlu0 %1786
        %1790 = vrot.lane.b32.xlu0 %v1759, 24
        %v1791 = vpop.permute.xlu0 %1790
        %v1793 = vsel %vm893, %v1615, %v1783
        %v1794 = vsel %vm1777, %v1793, %v1787
        %v1795 = vsel %vm1779, %v1794, %v1791
        %v1796 = vpack.c.bf16 %v1795, %v1780
        %v1797 = vld [vmem:[%s702] sm:$0xf]
        %v1798 = vld [vmem:[%s702 + $0x4] sm:$0xf]
        %v1799 = vld [vmem:[%s702 + $0x8] sm:$0xf]
        %v1800 = vld [vmem:[%s702 + $0xc] sm:$0xf]
        %v1801 = vld [vmem:[%s705] sm:$0x1]
        %v1803 = vlaneseq
        %v1804 = vshrl.u32 %v1803, 7
        %v1805 = vsub.s32 0, %v1804
        %v1806 = vrot.slane %v1801, %v1805
        %v1812 = vunpack.c.l.b16 %v1797
        %v1813 = vunpack.c.l.b16 %v1798
        %v1814 = vunpack.c.l.b16 %v1799
        %v1815 = vunpack.c.l.b16 %v1800
        %v1816 = vpack.c.b16 %v1813, %v1812
        %v1817 = vpack.c.b16 %v1815, %v1814
        %v1821 = vsel %vm750, %v1796, 0
        %1823 = vmatprep.subr.bf16.mxu0 0
        %1824 = vmatpush1.bf16.msra.mxu0 %v1816
        %1825 = vmatprep.subr.bf16.mxu0 0
        %1826 = vmatpush1.bf16.msra.mxu0 %v1817
        %1827 = vmatprep.subr.bf16.mxu0 0
        %1828 = vmatpush1.bf16.msra.mxu0 0
        %1829 = vmatprep.subr.bf16.mxu0 0
        %1830 = vmatpush1.bf16.msra.mxu0 0
        %1831 = vmatprep.subr.bf16.mxu0 0
        %1832 = vmatpush1.bf16.msra.mxu0 0
        %1833 = vmatprep.subr.bf16.mxu0 0
        %1834 = vmatpush1.bf16.msra.mxu0 0
        %1835 = vmatprep.subr.bf16.mxu0 0
        %1836 = vmatpush1.bf16.msra.mxu0 0
        %1837 = vmatprep.subr.bf16.mxu0 0
        %1838 = vmatpush1.bf16.msra.mxu0 0
        %1839 = vmatprep.subr.bf16.mxu0 0
        %1840 = vmatpush1.bf16.msra.mxu0 0
        %1841 = vmatprep.subr.bf16.mxu0 0
        %1842 = vmatpush1.bf16.msra.mxu0 0
        %1843 = vmatprep.subr.bf16.mxu0 0
        %1844 = vmatpush1.bf16.msra.mxu0 0
        %1845 = vmatprep.subr.bf16.mxu0 0
        %1846 = vmatpush1.bf16.msra.mxu0 0
        %1847 = vmatprep.subr.bf16.mxu0 0
        %1848 = vmatpush1.bf16.msra.mxu0 0
        %1849 = vmatprep.subr.bf16.mxu0 0
        %1850 = vmatpush1.bf16.msra.mxu0 0
        %1851 = vmatprep.subr.bf16.mxu0 0
        %1852 = vmatpush1.bf16.msra.mxu0 0
        %1853 = vmatprep.subr.bf16.mxu0 0
        %1854 = vmatpush1.bf16.msra.mxu0 0
        %1855 = vmatprep.mubr.bf16.mxu0 0
        %1856 = vmatmul.mubr.bf16.gmra.mrb[0].mxu0 %v1821
        %v1857 = vpop.f32.mrb[0].mxu0
        %v1858 = vadd.f32 %v1806, %v1857
        %v1859 = vpop.f32.mrb[0].mxu0
        %v1860 = vpop.f32.mrb[0].mxu0
        %v1861 = vadd.f32 %v1806, %v1860
        %v1862 = vpop.f32.mrb[0].mxu0
        %1863 = vdwg.mxu0
        %v1864 = vadd.f32 %v745, %v1858
        %v1865 = vadd.f32 %v746, %v1861
        %v1866 = vld [vmem:[%s730] sm:$0x1]
        %v1867 = vld [vmem:[%s733] sm:$0x1]
        %v1868 = vsel %vm750, %v1864, 0.0
        %1869 = vadd.xlane.f32.xlu0 %v1868
        %v1870 = vpop.xlane.xlu0 %1869
        %v1871 = vsel %vm750, %v1865, 0.0
        %1872 = vadd.xlane.f32.xlu0 %v1871
        %v1873 = vpop.xlane.xlu0 %1872
        %v1874 = vmul.f32 %v1870, %v757
        %v1875 = vmul.f32 %v1873, %v757
        %v1876 = vsub.f32 %v1864, %v1874
        %v1877 = vsub.f32 %v1865, %v1875
        %v1878 = vmul.f32 %v1876, %v1876
        %v1879 = vmul.f32 %v1877, %v1877
        %v1880 = vsel %vm750, %v1878, 0.0
        %1881 = vadd.xlane.f32.xlu0 %v1880
        %v1882 = vpop.xlane.xlu0 %1881
        %v1883 = vsel %vm750, %v1879, 0.0
        %1884 = vadd.xlane.f32.xlu0 %v1883
        %v1885 = vpop.xlane.xlu0 %1884
        %v1886 = vmul.f32 %v1882, %v757
        %v1887 = vmul.f32 %v1885, %v757
        %v1888 = vadd.f32 %v1886, 1e-05
        %v1889 = vadd.f32 %v1887, 1e-05
        %v1890 = vrsqrt.pop %v1888
        %v1891 = vrsqrt.pop %v1889
        %v1892 = vmul.f32 %v1876, %v1890
        %v1893 = vmul.f32 %v1877, %v1891
        %v1895 = vlaneseq
        %v1896 = vshrl.u32 %v1895, 7
        %v1897 = vsub.s32 0, %v1896
        %v1898 = vrot.slane %v1866, %v1897
        %v1900 = vmul.f32 %v1892, %v1898
        %v1901 = vmul.f32 %v1893, %v1898
        %v1903 = vlaneseq
        %v1904 = vshrl.u32 %v1903, 7
        %v1905 = vsub.s32 0, %v1904
        %v1906 = vrot.slane %v1867, %v1905
        %v1908 = vadd.f32 %v1900, %v1906
        %v1909 = vadd.f32 %v1901, %v1906
        %v1910 = vpack.c.bf16 %v1909, %v1908
        %v1911 = vld [vmem:[%s710] sm:$0xf]
        %v1912 = vld [vmem:[%s710 + $0x4] sm:$0xf]
        %v1913 = vld [vmem:[%s710 + $0x8] sm:$0xf]
        %v1914 = vld [vmem:[%s710 + $0xc] sm:$0xf]
        %v1915 = vld [vmem:[%s713] sm:$0x1]
        %v1917 = vlaneseq
        %v1918 = vshrl.u32 %v1917, 7
        %v1919 = vsub.s32 0, %v1918
        %v1920 = vrot.slane %v1915, %v1919
        %v1926 = vunpack.c.l.b16 %v1911
        %v1927 = vunpack.c.l.b16 %v1912
        %v1928 = vunpack.c.l.b16 %v1913
        %v1929 = vunpack.c.l.b16 %v1914
        %v1930 = vpack.c.b16 %v1927, %v1926
        %v1931 = vpack.c.b16 %v1929, %v1928
        %v1935 = vsel %vm750, %v1910, 0
        %1937 = vmatprep.subr.bf16.mxu0 0
        %1938 = vmatpush1.bf16.msra.mxu0 %v1930
        %1939 = vmatprep.subr.bf16.mxu0 0
        %1940 = vmatpush1.bf16.msra.mxu0 %v1931
        %1941 = vmatprep.subr.bf16.mxu0 0
        %1942 = vmatpush1.bf16.msra.mxu0 0
        %1943 = vmatprep.subr.bf16.mxu0 0
        %1944 = vmatpush1.bf16.msra.mxu0 0
        %1945 = vmatprep.subr.bf16.mxu0 0
        %1946 = vmatpush1.bf16.msra.mxu0 0
        %1947 = vmatprep.subr.bf16.mxu0 0
        %1948 = vmatpush1.bf16.msra.mxu0 0
        %1949 = vmatprep.subr.bf16.mxu0 0
        %1950 = vmatpush1.bf16.msra.mxu0 0
        %1951 = vmatprep.subr.bf16.mxu0 0
        %1952 = vmatpush1.bf16.msra.mxu0 0
        %1953 = vmatprep.subr.bf16.mxu0 0
        %1954 = vmatpush1.bf16.msra.mxu0 0
        %1955 = vmatprep.subr.bf16.mxu0 0
        %1956 = vmatpush1.bf16.msra.mxu0 0
        %1957 = vmatprep.subr.bf16.mxu0 0
        %1958 = vmatpush1.bf16.msra.mxu0 0
        %1959 = vmatprep.subr.bf16.mxu0 0
        %1960 = vmatpush1.bf16.msra.mxu0 0
        %1961 = vmatprep.subr.bf16.mxu0 0
        %1962 = vmatpush1.bf16.msra.mxu0 0
        %1963 = vmatprep.subr.bf16.mxu0 0
        %1964 = vmatpush1.bf16.msra.mxu0 0
        %1965 = vmatprep.subr.bf16.mxu0 0
        %1966 = vmatpush1.bf16.msra.mxu0 0
        %1967 = vmatprep.subr.bf16.mxu0 0
        %1968 = vmatpush1.bf16.msra.mxu0 0
        %1969 = vmatprep.mubr.bf16.mxu0 0
        %1970 = vmatmul.mubr.bf16.gmra.mrb[0].mxu0 %v1935
        %v1971 = vpop.f32.mrb[0].mxu0
        %v1972 = vadd.f32 %v1920, %v1971
        %v1973 = vpop.f32.mrb[0].mxu0
        %v1974 = vpop.f32.mrb[0].mxu0
        %v1975 = vadd.f32 %v1920, %v1974
        %v1976 = vpop.f32.mrb[0].mxu0
        %1977 = vdwg.mxu0
        %v1978 = vmax.f32 %v1972, 0.0
        %v1979 = vmax.f32 %v1975, 0.0
        %v1980 = vpack.c.bf16 %v1979, %v1978
        %v1981 = vld [vmem:[%s718] sm:$0xf]
        %v1982 = vld [vmem:[%s718 + $0x4] sm:$0xf]
        %v1983 = vld [vmem:[%s718 + $0x8] sm:$0xf]
        %v1984 = vld [vmem:[%s718 + $0xc] sm:$0xf]
        %v1985 = vld [vmem:[%s718 + $0x10] sm:$0xf]
        %v1986 = vld [vmem:[%s718 + $0x14] sm:$0xf]
        %v1987 = vld [vmem:[%s718 + $0x18] sm:$0xf]
        %v1988 = vld [vmem:[%s718 + $0x1c] sm:$0xf]
        %v1989 = vld [vmem:[%s721] sm:$0x1]
        %v1991 = vlaneseq
        %v1992 = vshrl.u32 %v1991, 7
        %v1993 = vsub.s32 0, %v1992
        %v1994 = vrot.slane %v1989, %v1993
        %v2004 = vunpack.c.l.b16 %v1981
        %v2005 = vunpack.c.l.b16 %v1982
        %v2006 = vunpack.c.l.b16 %v1983
        %v2007 = vunpack.c.l.b16 %v1984
        %v2008 = vunpack.c.l.b16 %v1985
        %v2009 = vunpack.c.l.b16 %v1986
        %v2010 = vunpack.c.l.b16 %v1987
        %v2011 = vunpack.c.l.b16 %v1988
        %v2012 = vpack.c.b16 %v2005, %v2004
        %v2013 = vpack.c.b16 %v2007, %v2006
        %v2014 = vpack.c.b16 %v2009, %v2008
        %v2015 = vpack.c.b16 %v2011, %v2010
        %vm2020 = vcmask 523264
        %v2022 = vsel %vm2020, %v1980, 0
        %2024 = vmatprep.subr.bf16.mxu0 0
        %2025 = vmatpush1.bf16.msra.mxu0 %v2012
        %2026 = vmatprep.subr.bf16.mxu0 0
        %2027 = vmatpush1.bf16.msra.mxu0 %v2013
        %2028 = vmatprep.subr.bf16.mxu0 0
        %2029 = vmatpush1.bf16.msra.mxu0 %v2014
        %2030 = vmatprep.subr.bf16.mxu0 0
        %2031 = vmatpush1.bf16.msra.mxu0 %v2015
        %2032 = vmatprep.subr.bf16.mxu0 0
        %2033 = vmatpush1.bf16.msra.mxu0 0
        %2034 = vmatprep.subr.bf16.mxu0 0
        %2035 = vmatpush1.bf16.msra.mxu0 0
        %2036 = vmatprep.subr.bf16.mxu0 0
        %2037 = vmatpush1.bf16.msra.mxu0 0
        %2038 = vmatprep.subr.bf16.mxu0 0
        %2039 = vmatpush1.bf16.msra.mxu0 0
        %2040 = vmatprep.subr.bf16.mxu0 0
        %2041 = vmatpush1.bf16.msra.mxu0 0
        %2042 = vmatprep.subr.bf16.mxu0 0
        %2043 = vmatpush1.bf16.msra.mxu0 0
        %2044 = vmatprep.subr.bf16.mxu0 0
        %2045 = vmatpush1.bf16.msra.mxu0 0
        %2046 = vmatprep.subr.bf16.mxu0 0
        %2047 = vmatpush1.bf16.msra.mxu0 0
        %2048 = vmatprep.subr.bf16.mxu0 0
        %2049 = vmatpush1.bf16.msra.mxu0 0
        %2050 = vmatprep.subr.bf16.mxu0 0
        %2051 = vmatpush1.bf16.msra.mxu0 0
        %2052 = vmatprep.subr.bf16.mxu0 0
        %2053 = vmatpush1.bf16.msra.mxu0 0
        %2054 = vmatprep.subr.bf16.mxu0 0
        %2055 = vmatpush1.bf16.msra.mxu0 0
        %2056 = vmatprep.mubr.bf16.mxu0 0
        %2057 = vmatmul.mubr.bf16.gmra.mrb[0].mxu0 %v2022
        %v2058 = vpop.f32.mrb[0].mxu0
        %v2059 = vadd.f32 %v1994, %v2058
        %v2060 = vpop.f32.mrb[0].mxu0
        %v2061 = vpop.f32.mrb[0].mxu0
        %v2062 = vadd.f32 %v1994, %v2061
        %v2063 = vpop.f32.mrb[0].mxu0
        %2064 = vdwg.mxu0
        %v2065 = vadd.f32 %v1864, %v2059
        %v2066 = vadd.f32 %v1865, %v2062
        %2067 = vst.msk [vmem:[#allocation2] sm:$0xff] %vm750, %v2065
        %2068 = vst.msk [vmem:[#allocation2 + $0x8] sm:$0xff] %vm750, %v2066
        %p2069 = scmp.eq.s32.totalorder %s35, 1
        // Predicated region
        $region97: #{tpu_custom_call.1} parent=83 // pred_check
          %p2070 = pneg %p2069
        $region98: #{tpu_custom_call.1} parent=83 // pred_check_branch
          %2072 = sbr.rel (%p2070) target = $region100
        $region99: #{tpu_custom_call.1} parent=83 // pred_region
          %v2073 = vld [vmem:[%s14] sm:$0x1]
          %v2074 = vld [vmem:[%s15] sm:$0x1]
          %v2075 = vsel %vm750, %v2065, 0.0
          %2076 = vadd.xlane.f32.xlu0 %v2075
          %v2077 = vpop.xlane.xlu0 %2076
          %v2078 = vsel %vm750, %v2066, 0.0
          %2079 = vadd.xlane.f32.xlu0 %v2078
          %v2080 = vpop.xlane.xlu0 %2079
          %v2081 = vmul.f32 %v2077, %v757
          %v2082 = vmul.f32 %v2080, %v757
          %v2083 = vsub.f32 %v2065, %v2081
          %v2084 = vsub.f32 %v2066, %v2082
          %v2085 = vmul.f32 %v2083, %v2083
          %v2086 = vmul.f32 %v2084, %v2084
          %v2087 = vsel %vm750, %v2085, 0.0
          %2088 = vadd.xlane.f32.xlu0 %v2087
          %v2089 = vpop.xlane.xlu0 %2088
          %v2090 = vsel %vm750, %v2086, 0.0
          %2091 = vadd.xlane.f32.xlu0 %v2090
          %v2092 = vpop.xlane.xlu0 %2091
          %v2093 = vmul.f32 %v2089, %v757
          %v2094 = vmul.f32 %v2092, %v757
          %v2095 = vadd.f32 %v2093, 1e-05
          %v2096 = vadd.f32 %v2094, 1e-05
          %v2097 = vrsqrt.pop %v2095
          %v2098 = vrsqrt.pop %v2096
          %v2099 = vmul.f32 %v2083, %v2097
          %v2100 = vmul.f32 %v2084, %v2098
          %v2102 = vlaneseq
          %v2103 = vshrl.u32 %v2102, 7
          %v2104 = vsub.s32 0, %v2103
          %v2105 = vrot.slane %v2073, %v2104
          %v2107 = vmul.f32 %v2099, %v2105
          %v2108 = vmul.f32 %v2100, %v2105
          %v2110 = vlaneseq
          %v2111 = vshrl.u32 %v2110, 7
          %v2112 = vsub.s32 0, %v2111
          %v2113 = vrot.slane %v2074, %v2112
          %v2115 = vadd.f32 %v2107, %v2113
          %v2116 = vadd.f32 %v2108, %v2113
          %2117 = vst.msk [vmem:[#allocation8] sm:$0xff] %vm750, %v2115
          %2118 = vst.msk [vmem:[#allocation8 + $0x8] sm:$0xff] %vm750, %v2116
        $region100: #{tpu_custom_call.1} parent=83 // pred_fallthru
          _
        // Predicated region
        $region101: #{tpu_custom_call.1} parent=83 // pred_check
          %p2119 = pneg %p461
        $region102: #{tpu_custom_call.1} parent=83 // pred_check_branch
          %2121 = sbr.rel (%p2119) target = $region104
        $region103: #{tpu_custom_call.1} parent=83 // pred_region
          %s2122 = smul.u32 2, %s34
          %s2124 = ssub.s32 256, 256
          %2125 = vsyncadd [#allocation5], %s2124
          %s2126 = smul.addr %s2122, 128
          %s2127 = scalar_lea.hbm %s16, %s2126
          %s2128 = sshll.u32 [#allocation8], 4
          %s2129 = int_to_ptr.vmem [resolvable:$true] %s2128
          %2134 = dma.vmem_to_hbm [thread:$0]  %s2129, 256, %s2127, [#allocation5], 128, 128, 8
        $region104: #{tpu_custom_call.1} parent=83 // pred_fallthru
          _
        // Predicated region
        $region105: #{tpu_custom_call.1} parent=83 // pred_check
          %p2135 = pneg %p461
        $region106: #{tpu_custom_call.1} parent=83 // pred_check_branch
          %2137 = sbr.rel (%p2135) target = $region108
        $region107: #{tpu_custom_call.1} parent=83 // pred_region
          %2138 = dma.done [#allocation5], 256
        $region108: #{tpu_custom_call.1} parent=83 // pred_fallthru
          _
      $region84: #{tpu_custom_call.1} parent=5 // pred_fallthru
        _
      %p2139 = scmp.le.s32.totalorder 2, %s25
      // Predicated region
      $region109: #{tpu_custom_call.1} parent=5 // pred_check
        %p2140 = pneg %p2139
      $region110: #{tpu_custom_call.1} parent=5 // pred_check_branch
        %2142 = sbr.rel (%p2140) target = $region112
      $region111: #{tpu_custom_call.1} parent=5 // pred_region
        %s2143 = ssub.s32 %s25, 2
      $region112: #{tpu_custom_call.1} parent=5 // pred_fallthru
        _
    $region6: #{tpu_custom_call.1} parent=1 // loop_footer
      %s29 = sadd.s32 1, %s25
    $region7: #{tpu_custom_call.1} parent=1 // loop_footer_branch
      %24 = sbr.rel target = $region3
    $region8: #{tpu_custom_call.1} parent=1 // loop_exit
      _
    %2144 = vsyncpa [#allocation4], 1
    %s2145 = scalar_lea.sflag [#allocation4], 1
    %2146 = vsyncpa %s2145, 1
    %2147 = vsyncpa [#allocation7], 1
    %2148 = vsyncpa [#allocation5], 1
    %s2149 = scalar_lea.sflag [#allocation5], 1
    %2150 = vsyncpa %s2149, 1

</llo_original>
